<compile_context>
chip_gen: v5e
topology: v5e:2x2
jax: 0.10.0
libtpu: 0.0.40
codegen_flags: <defaults>
</compile_context>

<pallas_src>
import functools

import jax
import jax.numpy as jnp
from jax.experimental import pallas as pl
from jax.experimental.pallas import tpu as pltpu


# ------------------------------- small helpers -------------------------------
def _round_up(x, m):
    return ((x + m - 1) // m) * m


def _pick_tile_m(m, bytes_per_row, resident_bytes, budget=32 << 20):
    """Largest M tile (<=256, multiple of 16/8) whose double-buffered tiles fit."""
    tile = min(256, _round_up(max(m, 1), 16))
    while tile > 16 and resident_bytes + 2 * tile * bytes_per_row > budget:
        tile //= 2
    return max(tile, 16)


_COMPILER_PARAMS = pltpu.CompilerParams(
    dimension_semantics=("parallel",),   # shard M tiles across TensorCores (v7x)
    vmem_limit_bytes=48 << 20,           # <= 64 MiB physical VMEM on v7x
)


# ------------------------------- Pallas kernels -------------------------------
def _matmul_bias_act_kernel(x_ref, w_ref, b_ref, o_ref, *, relu):
    # x: (TILE_M, K) bf16, w: (K, N) bf16, b: (1, N) f32 -> o: (TILE_M, N)
    acc = jnp.dot(x_ref[...], w_ref[...], preferred_element_type=jnp.float32)
    acc = acc + b_ref[...]
    if relu:
        acc = jnp.maximum(acc, 0.0)
    o_ref[...] = acc.astype(o_ref.dtype)


def _fc_fused_kernel(x_ref, w1_ref, b1_ref, w2_ref, b2_ref, o_ref):
    # Fused Linear -> ReLU -> Linear; both weight slabs stay resident in VMEM.
    h = jnp.dot(x_ref[...], w1_ref[...], preferred_element_type=jnp.float32)
    h = jnp.maximum(h + b1_ref[...], 0.0)
    out = jnp.dot(h.astype(jnp.bfloat16), w2_ref[...],
                  preferred_element_type=jnp.float32)
    o_ref[...] = (out + b2_ref[...]).astype(o_ref.dtype)


# ------------------------------ Pallas wrappers -------------------------------
def matmul_bias_act(x, w, b, *, relu, out_dtype=jnp.float32):
    """(M, K) @ (K, N) + b (optional ReLU). N must be a multiple of 128."""
    m, k = x.shape
    k2, n = w.shape
    assert k == k2 and n % 128 == 0, (x.shape, w.shape)
    tile_m = _pick_tile_m(m, bytes_per_row=2 * k + 4 * n,
                          resident_bytes=2 * k * n + 4 * n)
    m_pad = _round_up(m, tile_m)
    if m_pad != m:                                   # sublane-aligned, no partial tiles
        x = jnp.pad(x, ((0, m_pad - m), (0, 0)))
    x = x.astype(jnp.bfloat16)
    out = pl.pallas_call(
        functools.partial(_matmul_bias_act_kernel, relu=relu),
        out_shape=jax.ShapeDtypeStruct((m_pad, n), out_dtype),
        grid=(m_pad // tile_m,),
        in_specs=[
            pl.BlockSpec((tile_m, k), lambda i: (i, 0)),
            pl.BlockSpec((k, n), lambda i: (0, 0)),
            pl.BlockSpec((1, n), lambda i: (0, 0)),
        ],
        out_specs=pl.BlockSpec((tile_m, n), lambda i: (i, 0)),
        compiler_params=_COMPILER_PARAMS,
    )(x, w.astype(jnp.bfloat16), b.reshape(1, n).astype(jnp.float32))
    return out if m_pad == m else out[:m]


def fc_fused(x, w1, b1, w2, b2, *, out_dtype=jnp.float32):
    """relu(x @ w1 + b1) @ w2 + b2 in a single Pallas kernel (fused FC pair)."""
    m, k = x.shape
    k1, h = w1.shape
    h2, n = w2.shape
    assert k == k1 and h == h2 and h % 128 == 0 and n % 128 == 0
    tile_m = _pick_tile_m(m, bytes_per_row=2 * k + 4 * n,
                          resident_bytes=2 * k * h + 2 * h * n + 4 * (h + n))
    m_pad = _round_up(m, tile_m)
    if m_pad != m:
        x = jnp.pad(x, ((0, m_pad - m), (0, 0)))
    x = x.astype(jnp.bfloat16)
    out = pl.pallas_call(
        _fc_fused_kernel,
        out_shape=jax.ShapeDtypeStruct((m_pad, n), out_dtype),
        grid=(m_pad // tile_m,),
        in_specs=[
            pl.BlockSpec((tile_m, k), lambda i: (i, 0)),
            pl.BlockSpec((k, h), lambda i: (0, 0)),
            pl.BlockSpec((1, h), lambda i: (0, 0)),
            pl.BlockSpec((h, n), lambda i: (0, 0)),
            pl.BlockSpec((1, n), lambda i: (0, 0)),
        ],
        out_specs=pl.BlockSpec((tile_m, n), lambda i: (i, 0)),
        compiler_params=_COMPILER_PARAMS,
    )(x, w1.astype(jnp.bfloat16), b1.reshape(1, h).astype(jnp.float32),
      w2.astype(jnp.bfloat16), b2.reshape(1, n).astype(jnp.float32))
    return out if m_pad == m else out[:m]


# ------------------------------- conv via im2col ------------------------------
def conv2d_relu(x_nhwc, w2d, bias, *, kernel, stride, out_channels):
    """Valid-padding conv + ReLU. x: (N,H,W,C) bf16; w2d: (C*KH*KW, O_pad) bf16."""
    n = x_nhwc.shape[0]
    # Single XLA patch-extraction op; patch channel dim is ordered (c, kh, kw),
    # which matches PyTorch's OIHW weight flatten used to build w2d.
    patches = jax.lax.conv_general_dilated_patches(
        x_nhwc,
        filter_shape=(kernel, kernel),
        window_strides=(stride, stride),
        padding="VALID",
        dimension_numbers=("NHWC", "HWIO", "NHWC"),
    )
    oh, ow, k = patches.shape[1], patches.shape[2], patches.shape[3]
    out = matmul_bias_act(patches.reshape(n * oh * ow, k), w2d, bias,
                          relu=True, out_dtype=jnp.bfloat16)   # Pallas hot path
    out = out[:, :out_channels]              # drop lane padding (zero columns)
    return out.reshape(n, oh, ow, out_channels)                # stay NHWC


# --------------------------------- parameters ---------------------------------
def _conv_out_hw(size, k, s):
    return (size - k) // s + 1


def init_dqn_params(key, input_shape, n_actions):
    """Parameters in PyTorch layouts (conv OIHW, linear (out, in)) — the spec."""
    c, h, w = input_shape

    def uniform(key, shape, fan_in):
        bound = 1.0 / jnp.sqrt(float(fan_in))
        return jax.random.uniform(key, shape, jnp.float32, -bound, bound)

    ks = jax.random.split(key, 10)
    p = {}
    p["w1"] = uniform(ks[0], (32, c, 8, 8), c * 8 * 8)
    p["b1"] = uniform(ks[1], (32,), c * 8 * 8)
    p["w2"] = uniform(ks[2], (64, 32, 4, 4), 32 * 4 * 4)
    p["b2"] = uniform(ks[3], (64,), 32 * 4 * 4)
    p["w3"] = uniform(ks[4], (128, 64, 3, 3), 64 * 3 * 3)
    p["b3"] = uniform(ks[5], (128,), 64 * 3 * 3)

    oh = _conv_out_hw(_conv_out_hw(_conv_out_hw(h, 8, 4), 4, 2), 3, 1)
    ow = _conv_out_hw(_conv_out_hw(_conv_out_hw(w, 8, 4), 4, 2), 3, 1)
    conv_out = 128 * oh * ow

    p["fw1"] = uniform(ks[6], (512, conv_out), conv_out)
    p["fb1"] = uniform(ks[7], (512,), conv_out)
    p["fw2"] = uniform(ks[8], (n_actions, 512), 512)
    p["fb2"] = uniform(ks[9], (n_actions,), 512)
    return p


def prepare_params(tp, input_shape, n_actions):
    """One-time conversion to Pallas-friendly layouts (no per-call transposes)."""
    _, h, w = input_shape
    oh = _conv_out_hw(_conv_out_hw(_conv_out_hw(h, 8, 4), 4, 2), 3, 1)
    ow = _conv_out_hw(_conv_out_hw(_conv_out_hw(w, 8, 4), 4, 2), 3, 1)

    def conv_weight(wt):                 # (O,C,KH,KW) -> (C*KH*KW, O_pad) bf16
        o = wt.shape[0]
        k = wt.shape[1] * wt.shape[2] * wt.shape[3]
        w2d = wt.reshape(o, k).T
        o_pad = _round_up(o, 128)
        if o_pad != o:
            w2d = jnp.pad(w2d, ((0, 0), (0, o_pad - o)))
        return w2d.astype(jnp.bfloat16)

    def pad_bias(b):
        n = b.shape[0]
        n_pad = _round_up(n, 128)
        b = jnp.pad(b, (0, n_pad - n)) if n_pad != n else b
        return b.astype(jnp.float32)

    p = {}
    p["w1"], p["b1"] = conv_weight(tp["w1"]), pad_bias(tp["b1"])
    p["w2"], p["b2"] = conv_weight(tp["w2"]), pad_bias(tp["b2"])
    p["w3"], p["b3"] = conv_weight(tp["w3"]), pad_bias(tp["b3"])

    # PyTorch flattens the conv3 output NCHW as (c, i, j); the Pallas path keeps
    # the activation NHWC and flattens as (i, j, c), so permute fc1's input dim
    # once here instead of transposing the activation every forward pass.
    fw1 = tp["fw1"].reshape(512, 128, oh, ow).transpose(2, 3, 1, 0)
    p["fw1"] = fw1.reshape(oh * ow * 128, 512).astype(jnp.bfloat16)
    p["fb1"] = tp["fb1"].astype(jnp.float32)

    n_pad = _round_up(n_actions, 128)
    fw2 = jnp.pad(tp["fw2"].T, ((0, 0), (0, n_pad - n_actions)))
    p["fw2"] = fw2.astype(jnp.bfloat16)
    p["fb2"] = pad_bias(tp["fb2"])
    return p


# ---------------------------------- forward -----------------------------------
def dqn_forward(params, x, *, n_actions):
    """x: (B, C, H, W) float32 (NCHW like PyTorch) -> (B, n_actions) float32."""
    x = jnp.transpose(x, (0, 2, 3, 1)).astype(jnp.bfloat16)  # one-time NCHW->NHWC
    h = conv2d_relu(x, params["w1"], params["b1"], kernel=8, stride=4, out_channels=32)
    h = conv2d_relu(h, params["w2"], params["b2"], kernel=4, stride=2, out_channels=64)
    h = conv2d_relu(h, params["w3"], params["b3"], kernel=3, stride=1, out_channels=128)
    flat = h.reshape(h.shape[0], -1)          # NHWC flatten; fw1 rows pre-permuted
    out = fc_fused(flat, params["fw1"], params["fb1"], params["fw2"], params["fb2"])
    return out[:, :n_actions]                  # drop fc2 lane padding


def dqn_forward_ref(tp, x):
    """Pure-JAX f32 reference with exact PyTorch semantics (correctness check)."""
    def conv(x, w, b, stride):
        y = jax.lax.conv_general_dilated(
            x, w, window_strides=(stride, stride), padding="VALID",
            dimension_numbers=("NCHW", "OIHW", "NCHW"))
        return jax.nn.relu(y + b[None, :, None, None])

    h = conv(x, tp["w1"], tp["b1"], 4)
    h = conv(h, tp["w2"], tp["b2"], 2)
    h = conv(h, tp["w3"], tp["b3"], 1)
    flat = h.reshape(x.shape[0], -1)
    h = jax.nn.relu(flat @ tp["fw1"].T + tp["fb1"])
    return h @ tp["fw2"].T + tp["fb2"]


# ------------------------------------ main -------------------------------------
if __name__ == "__main__":
    key = jax.random.PRNGKey(0)
    k_param, k_x = jax.random.split(key)

    # Smallest CHW consistent with the conv stack (36 -> 8 -> 3 -> 1 spatial).
    input_shape = (4, 36, 36)
    n_actions = 6
    batch = 2

    torch_params = init_dqn_params(k_param, input_shape, n_actions)
    params = prepare_params(torch_params, input_shape, n_actions)
    x = jax.random.normal(k_x, (batch,) + input_shape, jnp.float32)

    fwd = jax.jit(functools.partial(dqn_forward, n_actions=n_actions))
    out = jax.block_until_ready(fwd(params, x))
    assert out.shape == (batch, n_actions), out.shape

    # Correctness vs a pure-JAX f32 reference; tolerance covers bf16 matmuls.
    ref = dqn_forward_ref(torch_params, x)
    err = float(jnp.max(jnp.abs(out.astype(jnp.float32) - ref)))
    scale = float(jnp.max(jnp.abs(ref)))
    assert err <= 5e-2 * (1.0 + scale), (err, scale)

    print("KERNEL_OK")
</pallas_src>

<mosaic_0001>
module attributes {stable_mosaic.version = 11 : i64} {
  func.func @_matmul_bias_act_kernel(%arg0: i32, %arg1: memref<128x256xbf16, #tpu.memory_space<vmem>>, %arg2: memref<256x128xbf16, #tpu.memory_space<vmem>>, %arg3: memref<1x128xf32, #tpu.memory_space<vmem>>, %arg4: memref<128x128xbf16, #tpu.memory_space<vmem>>) attributes {dimension_semantics = [#tpu.dimension_semantics<parallel>], iteration_bounds = array<i64: 1>, scalar_prefetch = 0 : i64, scratch_operands = 0 : i64, tpu.core_type = #tpu.core_type<tc>, window_params = [{transform_indices = @transform_0, window_bounds = array<i64: 128, 256>}, {pipeline_mode = #tpu.pipeline_mode<synchronous>, transform_indices = @transform_1, window_bounds = array<i64: 256, 128>}, {pipeline_mode = #tpu.pipeline_mode<synchronous>, transform_indices = @transform_2, window_bounds = array<i64: 1, 128>}, {transform_indices = @transform_3, window_bounds = array<i64: 128, 128>}]} {
    %c0 = arith.constant 0 : index
    %c0_0 = arith.constant 0 : index
    %0 = vector.load %arg1[%c0, %c0_0] : memref<128x256xbf16, #tpu.memory_space<vmem>>, vector<128x256xbf16>
    %c0_1 = arith.constant 0 : index
    %c0_2 = arith.constant 0 : index
    %1 = vector.load %arg2[%c0_1, %c0_2] : memref<256x128xbf16, #tpu.memory_space<vmem>>, vector<256x128xbf16>
    %cst = arith.constant dense<0.000000e+00> : vector<128x128xf32>
    %2 = tpu.matmul %0, %1, %cst {dimension_numbers = #tpu.dot_dimension_numbers<[1], [0], [0], [1], [0, 0, 1, 1], [], []>} : vector<128x256xbf16>, vector<256x128xbf16>, vector<128x128xf32> -> vector<128x128xf32>
    %c0_3 = arith.constant 0 : index
    %c0_4 = arith.constant 0 : index
    %3 = vector.load %arg3[%c0_3, %c0_4] : memref<1x128xf32, #tpu.memory_space<vmem>>, vector<1x128xf32>
    %4 = vector.broadcast %3 : vector<1x128xf32> to vector<128x128xf32>
    %5 = arith.addf %2, %4 : vector<128x128xf32>
    %cst_5 = arith.constant 0.000000e+00 : f32
    %6 = vector.broadcast %cst_5 : f32 to vector<128x128xf32>
    %7 = arith.maximumf %5, %6 : vector<128x128xf32>
    %8 = arith.truncf %7 : vector<128x128xf32> to vector<128x128xbf16>
    %c0_6 = arith.constant 0 : index
    %c0_7 = arith.constant 0 : index
    %9 = vector.load %arg4[%c0_6, %c0_7] : memref<128x128xbf16, #tpu.memory_space<vmem>>, vector<128x128xbf16>
    tpu.vector_store %arg4[%c0_6, %c0_7], %8 {strides = array<i32>} : memref<128x128xbf16, #tpu.memory_space<vmem>>, vector<128x128xbf16>,
    return
  }
  func.func @transform_0(%arg0: i32) -> (i32, i32) {
    %c0_i32 = arith.constant 0 : i32
    %c0_i32_0 = arith.constant 0 : i32
    return %arg0, %c0_i32 : i32, i32
  }
  func.func @transform_1(%arg0: i32) -> (i32, i32) {
    %c0_i32 = arith.constant 0 : i32
    %c0_i32_0 = arith.constant 0 : i32
    %c0_i32_1 = arith.constant 0 : i32
    return %c0_i32, %c0_i32_0 : i32, i32
  }
  func.func @transform_2(%arg0: i32) -> (i32, i32) {
    %c0_i32 = arith.constant 0 : i32
    %c0_i32_0 = arith.constant 0 : i32
    %c0_i32_1 = arith.constant 0 : i32
    return %c0_i32, %c0_i32_0 : i32, i32
  }
  func.func @transform_3(%arg0: i32) -> (i32, i32) {
    %c0_i32 = arith.constant 0 : i32
    %c0_i32_0 = arith.constant 0 : i32
    return %arg0, %c0_i32 : i32, i32
  }
}

module attributes {stable_mosaic.version = 11 : i64} {
  func.func @_matmul_bias_act_kernel(%arg0: i32, %arg1: memref<32x512xbf16, #tpu.memory_space<vmem>>, %arg2: memref<512x128xbf16, #tpu.memory_space<vmem>>, %arg3: memref<1x128xf32, #tpu.memory_space<vmem>>, %arg4: memref<32x128xbf16, #tpu.memory_space<vmem>>) attributes {dimension_semantics = [#tpu.dimension_semantics<parallel>], iteration_bounds = array<i64: 1>, scalar_prefetch = 0 : i64, scratch_operands = 0 : i64, tpu.core_type = #tpu.core_type<tc>, window_params = [{transform_indices = @transform_0, window_bounds = array<i64: 32, 512>}, {pipeline_mode = #tpu.pipeline_mode<synchronous>, transform_indices = @transform_1, window_bounds = array<i64: 512, 128>}, {pipeline_mode = #tpu.pipeline_mode<synchronous>, transform_indices = @transform_2, window_bounds = array<i64: 1, 128>}, {transform_indices = @transform_3, window_bounds = array<i64: 32, 128>}]} {
    %c0 = arith.constant 0 : index
    %c0_0 = arith.constant 0 : index
    %0 = vector.load %arg1[%c0, %c0_0] : memref<32x512xbf16, #tpu.memory_space<vmem>>, vector<32x512xbf16>
    %c0_1 = arith.constant 0 : index
    %c0_2 = arith.constant 0 : index
    %1 = vector.load %arg2[%c0_1, %c0_2] : memref<512x128xbf16, #tpu.memory_space<vmem>>, vector<512x128xbf16>
    %cst = arith.constant dense<0.000000e+00> : vector<32x128xf32>
    %2 = tpu.matmul %0, %1, %cst {dimension_numbers = #tpu.dot_dimension_numbers<[1], [0], [0], [1], [0, 0, 1, 1], [], []>} : vector<32x512xbf16>, vector<512x128xbf16>, vector<32x128xf32> -> vector<32x128xf32>
    %c0_3 = arith.constant 0 : index
    %c0_4 = arith.constant 0 : index
    %3 = vector.load %arg3[%c0_3, %c0_4] : memref<1x128xf32, #tpu.memory_space<vmem>>, vector<1x128xf32>
    %4 = vector.broadcast %3 : vector<1x128xf32> to vector<32x128xf32>
    %5 = arith.addf %2, %4 : vector<32x128xf32>
    %cst_5 = arith.constant 0.000000e+00 : f32
    %6 = vector.broadcast %cst_5 : f32 to vector<32x128xf32>
    %7 = arith.maximumf %5, %6 : vector<32x128xf32>
    %8 = arith.truncf %7 : vector<32x128xf32> to vector<32x128xbf16>
    %c0_6 = arith.constant 0 : index
    %c0_7 = arith.constant 0 : index
    %9 = vector.load %arg4[%c0_6, %c0_7] : memref<32x128xbf16, #tpu.memory_space<vmem>>, vector<32x128xbf16>
    tpu.vector_store %arg4[%c0_6, %c0_7], %8 {strides = array<i32>} : memref<32x128xbf16, #tpu.memory_space<vmem>>, vector<32x128xbf16>,
    return
  }
  func.func @transform_0(%arg0: i32) -> (i32, i32) {
    %c0_i32 = arith.constant 0 : i32
    %c0_i32_0 = arith.constant 0 : i32
    return %arg0, %c0_i32 : i32, i32
  }
  func.func @transform_1(%arg0: i32) -> (i32, i32) {
    %c0_i32 = arith.constant 0 : i32
    %c0_i32_0 = arith.constant 0 : i32
    %c0_i32_1 = arith.constant 0 : i32
    return %c0_i32, %c0_i32_0 : i32, i32
  }
  func.func @transform_2(%arg0: i32) -> (i32, i32) {
    %c0_i32 = arith.constant 0 : i32
    %c0_i32_0 = arith.constant 0 : i32
    %c0_i32_1 = arith.constant 0 : i32
    return %c0_i32, %c0_i32_0 : i32, i32
  }
  func.func @transform_3(%arg0: i32) -> (i32, i32) {
    %c0_i32 = arith.constant 0 : i32
    %c0_i32_0 = arith.constant 0 : i32
    return %arg0, %c0_i32 : i32, i32
  }
}

module attributes {stable_mosaic.version = 11 : i64} {
  func.func @_matmul_bias_act_kernel(%arg0: i32, %arg1: memref<16x576xbf16, #tpu.memory_space<vmem>>, %arg2: memref<576x128xbf16, #tpu.memory_space<vmem>>, %arg3: memref<1x128xf32, #tpu.memory_space<vmem>>, %arg4: memref<16x128xbf16, #tpu.memory_space<vmem>>) attributes {dimension_semantics = [#tpu.dimension_semantics<parallel>], iteration_bounds = array<i64: 1>, scalar_prefetch = 0 : i64, scratch_operands = 0 : i64, tpu.core_type = #tpu.core_type<tc>, window_params = [{transform_indices = @transform_0, window_bounds = array<i64: 16, 576>}, {pipeline_mode = #tpu.pipeline_mode<synchronous>, transform_indices = @transform_1, window_bounds = array<i64: 576, 128>}, {pipeline_mode = #tpu.pipeline_mode<synchronous>, transform_indices = @transform_2, window_bounds = array<i64: 1, 128>}, {transform_indices = @transform_3, window_bounds = array<i64: 16, 128>}]} {
    %c0 = arith.constant 0 : index
    %c0_0 = arith.constant 0 : index
    %0 = vector.load %arg1[%c0, %c0_0] : memref<16x576xbf16, #tpu.memory_space<vmem>>, vector<16x576xbf16>
    %c0_1 = arith.constant 0 : index
    %c0_2 = arith.constant 0 : index
    %1 = vector.load %arg2[%c0_1, %c0_2] : memref<576x128xbf16, #tpu.memory_space<vmem>>, vector<576x128xbf16>
    %cst = arith.constant dense<0.000000e+00> : vector<16x128xf32>
    %2 = tpu.matmul %0, %1, %cst {dimension_numbers = #tpu.dot_dimension_numbers<[1], [0], [0], [1], [0, 0, 1, 1], [], []>} : vector<16x576xbf16>, vector<576x128xbf16>, vector<16x128xf32> -> vector<16x128xf32>
    %c0_3 = arith.constant 0 : index
    %c0_4 = arith.constant 0 : index
    %3 = vector.load %arg3[%c0_3, %c0_4] : memref<1x128xf32, #tpu.memory_space<vmem>>, vector<1x128xf32>
    %4 = vector.broadcast %3 : vector<1x128xf32> to vector<16x128xf32>
    %5 = arith.addf %2, %4 : vector<16x128xf32>
    %cst_5 = arith.constant 0.000000e+00 : f32
    %6 = vector.broadcast %cst_5 : f32 to vector<16x128xf32>
    %7 = arith.maximumf %5, %6 : vector<16x128xf32>
    %8 = arith.truncf %7 : vector<16x128xf32> to vector<16x128xbf16>
    %c0_6 = arith.constant 0 : index
    %c0_7 = arith.constant 0 : index
    %9 = vector.load %arg4[%c0_6, %c0_7] : memref<16x128xbf16, #tpu.memory_space<vmem>>, vector<16x128xbf16>
    tpu.vector_store %arg4[%c0_6, %c0_7], %8 {strides = array<i32>} : memref<16x128xbf16, #tpu.memory_space<vmem>>, vector<16x128xbf16>,
    return
  }
  func.func @transform_0(%arg0: i32) -> (i32, i32) {
    %c0_i32 = arith.constant 0 : i32
    %c0_i32_0 = arith.constant 0 : i32
    return %arg0, %c0_i32 : i32, i32
  }
  func.func @transform_1(%arg0: i32) -> (i32, i32) {
    %c0_i32 = arith.constant 0 : i32
    %c0_i32_0 = arith.constant 0 : i32
    %c0_i32_1 = arith.constant 0 : i32
    return %c0_i32, %c0_i32_0 : i32, i32
  }
  func.func @transform_2(%arg0: i32) -> (i32, i32) {
    %c0_i32 = arith.constant 0 : i32
    %c0_i32_0 = arith.constant 0 : i32
    %c0_i32_1 = arith.constant 0 : i32
    return %c0_i32, %c0_i32_0 : i32, i32
  }
  func.func @transform_3(%arg0: i32) -> (i32, i32) {
    %c0_i32 = arith.constant 0 : i32
    %c0_i32_0 = arith.constant 0 : i32
    return %arg0, %c0_i32 : i32, i32
  }
}

module attributes {stable_mosaic.version = 11 : i64} {
  func.func @_fc_fused_kernel(%arg0: i32, %arg1: memref<16x128xbf16, #tpu.memory_space<vmem>>, %arg2: memref<128x512xbf16, #tpu.memory_space<vmem>>, %arg3: memref<1x512xf32, #tpu.memory_space<vmem>>, %arg4: memref<512x128xbf16, #tpu.memory_space<vmem>>, %arg5: memref<1x128xf32, #tpu.memory_space<vmem>>, %arg6: memref<16x128xf32, #tpu.memory_space<vmem>>) attributes {dimension_semantics = [#tpu.dimension_semantics<parallel>], iteration_bounds = array<i64: 1>, scalar_prefetch = 0 : i64, scratch_operands = 0 : i64, tpu.core_type = #tpu.core_type<tc>, window_params = [{transform_indices = @transform_0, window_bounds = array<i64: 16, 128>}, {pipeline_mode = #tpu.pipeline_mode<synchronous>, transform_indices = @transform_1, window_bounds = array<i64: 128, 512>}, {pipeline_mode = #tpu.pipeline_mode<synchronous>, transform_indices = @transform_2, window_bounds = array<i64: 1, 512>}, {pipeline_mode = #tpu.pipeline_mode<synchronous>, transform_indices = @transform_3, window_bounds = array<i64: 512, 128>}, {pipeline_mode = #tpu.pipeline_mode<synchronous>, transform_indices = @transform_4, window_bounds = array<i64: 1, 128>}, {transform_indices = @transform_5, window_bounds = array<i64: 16, 128>}]} {
    %c0 = arith.constant 0 : index
    %c0_0 = arith.constant 0 : index
    %0 = vector.load %arg1[%c0, %c0_0] : memref<16x128xbf16, #tpu.memory_space<vmem>>, vector<16x128xbf16>
    %c0_1 = arith.constant 0 : index
    %c0_2 = arith.constant 0 : index
    %1 = vector.load %arg2[%c0_1, %c0_2] : memref<128x512xbf16, #tpu.memory_space<vmem>>, vector<128x512xbf16>
    %cst = arith.constant dense<0.000000e+00> : vector<16x512xf32>
    %2 = tpu.matmul %0, %1, %cst {dimension_numbers = #tpu.dot_dimension_numbers<[1], [0], [0], [1], [0, 0, 1, 1], [], []>} : vector<16x128xbf16>, vector<128x512xbf16>, vector<16x512xf32> -> vector<16x512xf32>
    %c0_3 = arith.constant 0 : index
    %c0_4 = arith.constant 0 : index
    %3 = vector.load %arg3[%c0_3, %c0_4] : memref<1x512xf32, #tpu.memory_space<vmem>>, vector<1x512xf32>
    %4 = vector.broadcast %3 : vector<1x512xf32> to vector<16x512xf32>
    %5 = arith.addf %2, %4 : vector<16x512xf32>
    %cst_5 = arith.constant 0.000000e+00 : f32
    %6 = vector.broadcast %cst_5 : f32 to vector<16x512xf32>
    %7 = arith.maximumf %5, %6 : vector<16x512xf32>
    %8 = arith.truncf %7 : vector<16x512xf32> to vector<16x512xbf16>
    %c0_6 = arith.constant 0 : index
    %c0_7 = arith.constant 0 : index
    %9 = vector.load %arg4[%c0_6, %c0_7] : memref<512x128xbf16, #tpu.memory_space<vmem>>, vector<512x128xbf16>
    %cst_8 = arith.constant dense<0.000000e+00> : vector<16x128xf32>
    %10 = tpu.matmul %8, %9, %cst_8 {dimension_numbers = #tpu.dot_dimension_numbers<[1], [0], [0], [1], [0, 0, 1, 1], [], []>} : vector<16x512xbf16>, vector<512x128xbf16>, vector<16x128xf32> -> vector<16x128xf32>
    %c0_9 = arith.constant 0 : index
    %c0_10 = arith.constant 0 : index
    %11 = vector.load %arg5[%c0_9, %c0_10] : memref<1x128xf32, #tpu.memory_space<vmem>>, vector<1x128xf32>
    %12 = vector.broadcast %11 : vector<1x128xf32> to vector<16x128xf32>
    %13 = arith.addf %10, %12 : vector<16x128xf32>
    %c0_11 = arith.constant 0 : index
    %c0_12 = arith.constant 0 : index
    %14 = vector.load %arg6[%c0_11, %c0_12] : memref<16x128xf32, #tpu.memory_space<vmem>>, vector<16x128xf32>
    tpu.vector_store %arg6[%c0_11, %c0_12], %13 {strides = array<i32>} : memref<16x128xf32, #tpu.memory_space<vmem>>, vector<16x128xf32>,
    return
  }
  func.func @transform_0(%arg0: i32) -> (i32, i32) {
    %c0_i32 = arith.constant 0 : i32
    %c0_i32_0 = arith.constant 0 : i32
    return %arg0, %c0_i32 : i32, i32
  }
  func.func @transform_1(%arg0: i32) -> (i32, i32) {
    %c0_i32 = arith.constant 0 : i32
    %c0_i32_0 = arith.constant 0 : i32
    %c0_i32_1 = arith.constant 0 : i32
    return %c0_i32, %c0_i32_0 : i32, i32
  }
  func.func @transform_2(%arg0: i32) -> (i32, i32) {
    %c0_i32 = arith.constant 0 : i32
    %c0_i32_0 = arith.constant 0 : i32
    %c0_i32_1 = arith.constant 0 : i32
    return %c0_i32, %c0_i32_0 : i32, i32
  }
  func.func @transform_3(%arg0: i32) -> (i32, i32) {
    %c0_i32 = arith.constant 0 : i32
    %c0_i32_0 = arith.constant 0 : i32
    %c0_i32_1 = arith.constant 0 : i32
    return %c0_i32, %c0_i32_0 : i32, i32
  }
  func.func @transform_4(%arg0: i32) -> (i32, i32) {
    %c0_i32 = arith.constant 0 : i32
    %c0_i32_0 = arith.constant 0 : i32
    %c0_i32_1 = arith.constant 0 : i32
    return %c0_i32, %c0_i32_0 : i32, i32
  }
  func.func @transform_5(%arg0: i32) -> (i32, i32) {
    %c0_i32 = arith.constant 0 : i32
    %c0_i32_0 = arith.constant 0 : i32
    return %arg0, %c0_i32 : i32, i32
  }
}

</mosaic_0001>

<llo_original>
// kernel: dqn_forward.4
$region0: #{dqn_forward.4}
  #allocation0 [shape = 'u32[]', space=smem, size = 0x4, offset = 0x4, fixed_abs, tag = 'smem constant byte address 0x4 - core index']
  #allocation1 [shape = 'u32[72,128]{1,0:T(1,128)}', space=vmem, size = 0x9000, scoped, tag = 'internal scratch']
  %s0 = inlined_call_operand.vmem [shape: bf16[128,256], index: 0, kind: input, shape index: {}]
  %s1 = inlined_call_operand.vmem [shape: bf16[256,128], index: 1, kind: input, shape index: {}]
  %s2 = inlined_call_operand.vmem [shape: f32[1,128], index: 2, kind: input, shape index: {}]
  %s3 = inlined_call_operand.vmem [shape: bf16[128,128], index: 3, kind: output, shape index: {}]
  %s4 = sld [smem:[#allocation0]]
  $region22: #{dqn_forward.4} parent=0
    _
  %s6 = ssub.s32 1, %s4
  %s7 = scalar_select 0, %s6, %s4
  // Predicated region
  $region2: #{dqn_forward.4} parent=0 // pred_check
    _
  $region3: #{dqn_forward.4} parent=0 // pred_check_branch
    %9 = sbr.rel (0) target = $region5
  $region4: #{dqn_forward.4} parent=0 // pred_region
    _
  $region5: #{dqn_forward.4} parent=0 // pred_fallthru
    _
  // Predicated region
  $region6: #{dqn_forward.4} parent=0 // pred_check
    _
  $region7: #{dqn_forward.4} parent=0 // pred_check_branch
    %11 = sbr.rel (0) target = $region9
  $region8: #{dqn_forward.4} parent=0 // pred_region
    _
  $region9: #{dqn_forward.4} parent=0 // pred_fallthru
    _
  // Predicated region
  $region10: #{dqn_forward.4} parent=0 // pred_check
    _
  $region11: #{dqn_forward.4} parent=0 // pred_check_branch
    %13 = sbr.rel (0) target = $region13
  $region12: #{dqn_forward.4} parent=0 // pred_region
    _
  $region13: #{dqn_forward.4} parent=0 // pred_fallthru
    _
  %v14 = vld [vmem:[%s0] sm:$0xff]
  %v15 = vld [vmem:[%s0 + $0x8] sm:$0xff]
  %v16 = vld [vmem:[%s0 + $0x10] sm:$0xff]
  %v17 = vld [vmem:[%s0 + $0x18] sm:$0xff]
  %v18 = vld [vmem:[%s0 + $0x20] sm:$0xff]
  %v19 = vld [vmem:[%s0 + $0x28] sm:$0xff]
  %v20 = vld [vmem:[%s0 + $0x30] sm:$0xff]
  %v21 = vld [vmem:[%s0 + $0x38] sm:$0xff]
  %v22 = vld [vmem:[%s0 + $0x40] sm:$0xff]
  %v23 = vld [vmem:[%s0 + $0x48] sm:$0xff]
  %v24 = vld [vmem:[%s0 + $0x50] sm:$0xff]
  %v25 = vld [vmem:[%s0 + $0x58] sm:$0xff]
  %v26 = vld [vmem:[%s0 + $0x60] sm:$0xff]
  %v27 = vld [vmem:[%s0 + $0x68] sm:$0xff]
  %v28 = vld [vmem:[%s0 + $0x70] sm:$0xff]
  %v29 = vld [vmem:[%s0 + $0x78] sm:$0xff]
  %v30 = vld [vmem:[%s1] sm:$0xf]
  %v31 = vld [vmem:[%s1 + $0x4] sm:$0xf]
  %v32 = vld [vmem:[%s1 + $0x8] sm:$0xf]
  %v33 = vld [vmem:[%s1 + $0xc] sm:$0xf]
  %v34 = vld [vmem:[%s1 + $0x10] sm:$0xf]
  %v35 = vld [vmem:[%s1 + $0x14] sm:$0xf]
  %v36 = vld [vmem:[%s1 + $0x18] sm:$0xf]
  %v37 = vld [vmem:[%s1 + $0x1c] sm:$0xf]
  %v38 = vld [vmem:[%s1 + $0x20] sm:$0xf]
  %v39 = vld [vmem:[%s1 + $0x24] sm:$0xf]
  %v40 = vld [vmem:[%s1 + $0x28] sm:$0xf]
  %v41 = vld [vmem:[%s1 + $0x2c] sm:$0xf]
  %v42 = vld [vmem:[%s1 + $0x30] sm:$0xf]
  %v43 = vld [vmem:[%s1 + $0x34] sm:$0xf]
  %v44 = vld [vmem:[%s1 + $0x38] sm:$0xf]
  %v45 = vld [vmem:[%s1 + $0x3c] sm:$0xf]
  %v46 = vld [vmem:[%s1 + $0x40] sm:$0xf]
  %v47 = vld [vmem:[%s1 + $0x44] sm:$0xf]
  %v48 = vld [vmem:[%s1 + $0x48] sm:$0xf]
  %v49 = vld [vmem:[%s1 + $0x4c] sm:$0xf]
  %v50 = vld [vmem:[%s1 + $0x50] sm:$0xf]
  %v51 = vld [vmem:[%s1 + $0x54] sm:$0xf]
  %v52 = vld [vmem:[%s1 + $0x58] sm:$0xf]
  %v53 = vld [vmem:[%s1 + $0x5c] sm:$0xf]
  %v54 = vld [vmem:[%s1 + $0x60] sm:$0xf]
  %v55 = vld [vmem:[%s1 + $0x64] sm:$0xf]
  %v56 = vld [vmem:[%s1 + $0x68] sm:$0xf]
  %v57 = vld [vmem:[%s1 + $0x6c] sm:$0xf]
  %v58 = vld [vmem:[%s1 + $0x70] sm:$0xf]
  %v59 = vld [vmem:[%s1 + $0x74] sm:$0xf]
  %v60 = vld [vmem:[%s1 + $0x78] sm:$0xf]
  %v61 = vld [vmem:[%s1 + $0x7c] sm:$0xf]
  %v62 = vld [vmem:[%s2] sm:$0x1]
  %v64 = vperm.slane %v62, 0
  %v82 = vunpack.c.l.b16 %v14
  %v83 = vunpack.c.h.b16 %v14
  %v84 = vunpack.c.l.b16 %v15
  %v85 = vunpack.c.h.b16 %v15
  %v86 = vunpack.c.l.b16 %v16
  %v87 = vunpack.c.h.b16 %v16
  %v88 = vunpack.c.l.b16 %v17
  %v89 = vunpack.c.h.b16 %v17
  %v90 = vunpack.c.l.b16 %v18
  %v91 = vunpack.c.h.b16 %v18
  %v92 = vunpack.c.l.b16 %v19
  %v93 = vunpack.c.h.b16 %v19
  %v94 = vunpack.c.l.b16 %v20
  %v95 = vunpack.c.h.b16 %v20
  %v96 = vunpack.c.l.b16 %v21
  %v97 = vunpack.c.h.b16 %v21
  %v98 = vunpack.c.l.b16 %v22
  %v99 = vunpack.c.h.b16 %v22
  %v100 = vunpack.c.l.b16 %v23
  %v101 = vunpack.c.h.b16 %v23
  %v102 = vunpack.c.l.b16 %v24
  %v103 = vunpack.c.h.b16 %v24
  %v104 = vunpack.c.l.b16 %v25
  %v105 = vunpack.c.h.b16 %v25
  %v106 = vunpack.c.l.b16 %v26
  %v107 = vunpack.c.h.b16 %v26
  %v108 = vunpack.c.l.b16 %v27
  %v109 = vunpack.c.h.b16 %v27
  %v110 = vunpack.c.l.b16 %v28
  %v111 = vunpack.c.h.b16 %v28
  %v112 = vunpack.c.l.b16 %v29
  %v113 = vunpack.c.h.b16 %v29
  %v114 = vpack.c.b16 %v84, %v82
  %v115 = vpack.c.b16 %v85, %v83
  %v116 = vpack.c.b16 %v88, %v86
  %v117 = vpack.c.b16 %v89, %v87
  %v118 = vpack.c.b16 %v92, %v90
  %v119 = vpack.c.b16 %v93, %v91
  %v120 = vpack.c.b16 %v96, %v94
  %v121 = vpack.c.b16 %v97, %v95
  %v122 = vpack.c.b16 %v100, %v98
  %v123 = vpack.c.b16 %v101, %v99
  %v124 = vpack.c.b16 %v104, %v102
  %v125 = vpack.c.b16 %v105, %v103
  %v126 = vpack.c.b16 %v108, %v106
  %v127 = vpack.c.b16 %v109, %v107
  %v128 = vpack.c.b16 %v112, %v110
  %v129 = vpack.c.b16 %v113, %v111
  %v178 = vunpack.c.l.b16 %v30
  %v179 = vunpack.c.l.b16 %v31
  %v180 = vunpack.c.l.b16 %v32
  %v181 = vunpack.c.l.b16 %v33
  %v182 = vunpack.c.l.b16 %v34
  %v183 = vunpack.c.l.b16 %v35
  %v184 = vunpack.c.l.b16 %v36
  %v185 = vunpack.c.l.b16 %v37
  %v186 = vunpack.c.l.b16 %v38
  %v187 = vunpack.c.l.b16 %v39
  %v188 = vunpack.c.l.b16 %v40
  %v189 = vunpack.c.l.b16 %v41
  %v190 = vunpack.c.l.b16 %v42
  %v191 = vunpack.c.l.b16 %v43
  %v192 = vunpack.c.l.b16 %v44
  %v193 = vunpack.c.l.b16 %v45
  %v194 = vunpack.c.l.b16 %v46
  %v195 = vunpack.c.l.b16 %v47
  %v196 = vunpack.c.l.b16 %v48
  %v197 = vunpack.c.l.b16 %v49
  %v198 = vunpack.c.l.b16 %v50
  %v199 = vunpack.c.l.b16 %v51
  %v200 = vunpack.c.l.b16 %v52
  %v201 = vunpack.c.l.b16 %v53
  %v202 = vunpack.c.l.b16 %v54
  %v203 = vunpack.c.l.b16 %v55
  %v204 = vunpack.c.l.b16 %v56
  %v205 = vunpack.c.l.b16 %v57
  %v206 = vunpack.c.l.b16 %v58
  %v207 = vunpack.c.l.b16 %v59
  %v208 = vunpack.c.l.b16 %v60
  %v209 = vunpack.c.l.b16 %v61
  %v210 = vpack.c.b16 %v179, %v178
  %v211 = vpack.c.b16 %v181, %v180
  %v212 = vpack.c.b16 %v183, %v182
  %v213 = vpack.c.b16 %v185, %v184
  %v214 = vpack.c.b16 %v187, %v186
  %v215 = vpack.c.b16 %v189, %v188
  %v216 = vpack.c.b16 %v191, %v190
  %v217 = vpack.c.b16 %v193, %v192
  %v218 = vpack.c.b16 %v195, %v194
  %v219 = vpack.c.b16 %v197, %v196
  %v220 = vpack.c.b16 %v199, %v198
  %v221 = vpack.c.b16 %v201, %v200
  %v222 = vpack.c.b16 %v203, %v202
  %v223 = vpack.c.b16 %v205, %v204
  %v224 = vpack.c.b16 %v207, %v206
  %v225 = vpack.c.b16 %v209, %v208
  %242 = vmatpush.bf16.msra.mxu0 %v217
  %243 = vmatpush.bf16.msra.mxu0 %v216
  %244 = vmatpush.bf16.msra.mxu0 %v215
  %245 = vmatpush.bf16.msra.mxu0 %v214
  %246 = vmatpush.bf16.msra.mxu0 %v213
  %247 = vmatpush.bf16.msra.mxu0 %v212
  %248 = vmatpush.bf16.msra.mxu0 %v211
  %249 = vmatpush.bf16.msra.mxu0 %v210
  %250 = vmatmul.bf16.gmra.mxu0 %v114
  %v251 = vpop.f32.mrf.mxu0
  %v252 = vadd.f32 %v64, %v251
  %v253 = vpop.f32.mrf.mxu0
  %v254 = vadd.f32 %v64, %v253
  %255 = vmatmul.bf16.gmra.mxu0 %v116
  %v256 = vpop.f32.mrf.mxu0
  %v257 = vadd.f32 %v64, %v256
  %v258 = vpop.f32.mrf.mxu0
  %v259 = vadd.f32 %v64, %v258
  %260 = vmatmul.bf16.gmra.mxu0 %v118
  %v261 = vpop.f32.mrf.mxu0
  %v262 = vadd.f32 %v64, %v261
  %v263 = vpop.f32.mrf.mxu0
  %v264 = vadd.f32 %v64, %v263
  %265 = vmatmul.bf16.gmra.mxu0 %v120
  %v266 = vpop.f32.mrf.mxu0
  %v267 = vadd.f32 %v64, %v266
  %v268 = vpop.f32.mrf.mxu0
  %v269 = vadd.f32 %v64, %v268
  %270 = vmatmul.bf16.gmra.mxu0 %v122
  %v271 = vpop.f32.mrf.mxu0
  %v272 = vadd.f32 %v64, %v271
  %v273 = vpop.f32.mrf.mxu0
  %v274 = vadd.f32 %v64, %v273
  %275 = vmatmul.bf16.gmra.mxu0 %v124
  %v276 = vpop.f32.mrf.mxu0
  %v277 = vadd.f32 %v64, %v276
  %v278 = vpop.f32.mrf.mxu0
  %v279 = vadd.f32 %v64, %v278
  %280 = vmatmul.bf16.gmra.mxu0 %v126
  %v281 = vpop.f32.mrf.mxu0
  %v282 = vadd.f32 %v64, %v281
  %v283 = vpop.f32.mrf.mxu0
  %v284 = vadd.f32 %v64, %v283
  %285 = vmatmul.bf16.gmra.mxu0 %v128
  %v286 = vpop.f32.mrf.mxu0
  %v287 = vadd.f32 %v64, %v286
  %v288 = vpop.f32.mrf.mxu0
  %v289 = vadd.f32 %v64, %v288
  %290 = vdwg.mxu0
  %291 = vmatpush.bf16.msra.mxu0 %v225
  %292 = vmatpush.bf16.msra.mxu0 %v224
  %293 = vmatpush.bf16.msra.mxu0 %v223
  %294 = vmatpush.bf16.msra.mxu0 %v222
  %295 = vmatpush.bf16.msra.mxu0 %v221
  %296 = vmatpush.bf16.msra.mxu0 %v220
  %297 = vmatpush.bf16.msra.mxu0 %v219
  %298 = vmatpush.bf16.msra.mxu0 %v218
  %299 = vmatmul.bf16.gmra.mxu0 %v115
  %v300 = vpop.f32.mrf.mxu0
  %v301 = vadd.f32 %v252, %v300
  %v302 = vpop.f32.mrf.mxu0
  %v303 = vadd.f32 %v254, %v302
  %304 = vmatmul.bf16.gmra.mxu0 %v117
  %v305 = vpop.f32.mrf.mxu0
  %v306 = vadd.f32 %v257, %v305
  %v307 = vpop.f32.mrf.mxu0
  %v308 = vadd.f32 %v259, %v307
  %309 = vmatmul.bf16.gmra.mxu0 %v119
  %v310 = vpop.f32.mrf.mxu0
  %v311 = vadd.f32 %v262, %v310
  %v312 = vpop.f32.mrf.mxu0
  %v313 = vadd.f32 %v264, %v312
  %314 = vmatmul.bf16.gmra.mxu0 %v121
  %v315 = vpop.f32.mrf.mxu0
  %v316 = vadd.f32 %v267, %v315
  %v317 = vpop.f32.mrf.mxu0
  %v318 = vadd.f32 %v269, %v317
  %319 = vmatmul.bf16.gmra.mxu0 %v123
  %v320 = vpop.f32.mrf.mxu0
  %v321 = vadd.f32 %v272, %v320
  %v322 = vpop.f32.mrf.mxu0
  %v323 = vadd.f32 %v274, %v322
  %324 = vmatmul.bf16.gmra.mxu0 %v125
  %v325 = vpop.f32.mrf.mxu0
  %v326 = vadd.f32 %v277, %v325
  %v327 = vpop.f32.mrf.mxu0
  %v328 = vadd.f32 %v279, %v327
  %329 = vmatmul.bf16.gmra.mxu0 %v127
  %v330 = vpop.f32.mrf.mxu0
  %v331 = vadd.f32 %v282, %v330
  %v332 = vpop.f32.mrf.mxu0
  %v333 = vadd.f32 %v284, %v332
  %334 = vmatmul.bf16.gmra.mxu0 %v129
  %v335 = vpop.f32.mrf.mxu0
  %v336 = vadd.f32 %v287, %v335
  %v337 = vpop.f32.mrf.mxu0
  %v338 = vadd.f32 %v289, %v337
  %339 = vdwg.mxu0
  %v340 = vmax.f32 %v301, 0.0
  %v341 = vmax.f32 %v303, 0.0
  %v342 = vmax.f32 %v306, 0.0
  %v343 = vmax.f32 %v308, 0.0
  %v344 = vmax.f32 %v311, 0.0
  %v345 = vmax.f32 %v313, 0.0
  %v346 = vmax.f32 %v316, 0.0
  %v347 = vmax.f32 %v318, 0.0
  %v348 = vmax.f32 %v321, 0.0
  %v349 = vmax.f32 %v323, 0.0
  %v350 = vmax.f32 %v326, 0.0
  %v351 = vmax.f32 %v328, 0.0
  %v352 = vmax.f32 %v331, 0.0
  %v353 = vmax.f32 %v333, 0.0
  %v354 = vmax.f32 %v336, 0.0
  %v355 = vmax.f32 %v338, 0.0
  %v356 = vpack.c.bf16 %v340, %v340
  %v357 = vpack.c.bf16 %v341, %v341
  %v358 = vpack.c.bf16 %v342, %v342
  %v359 = vpack.c.bf16 %v343, %v343
  %v360 = vpack.c.bf16 %v344, %v344
  %v361 = vpack.c.bf16 %v345, %v345
  %v362 = vpack.c.bf16 %v346, %v346
  %v363 = vpack.c.bf16 %v347, %v347
  %v364 = vpack.c.bf16 %v348, %v348
  %v365 = vpack.c.bf16 %v349, %v349
  %v366 = vpack.c.bf16 %v350, %v350
  %v367 = vpack.c.bf16 %v351, %v351
  %v368 = vpack.c.bf16 %v352, %v352
  %v369 = vpack.c.bf16 %v353, %v353
  %v370 = vpack.c.bf16 %v354, %v354
  %v371 = vpack.c.bf16 %v355, %v355
  %372 = vst [vmem:[%s3] sm:$0xf] %v356
  %373 = vst [vmem:[%s3 + $0x4] sm:$0xf] %v357
  %374 = vst [vmem:[%s3 + $0x8] sm:$0xf] %v358
  %375 = vst [vmem:[%s3 + $0xc] sm:$0xf] %v359
  %376 = vst [vmem:[%s3 + $0x10] sm:$0xf] %v360
  %377 = vst [vmem:[%s3 + $0x14] sm:$0xf] %v361
  %378 = vst [vmem:[%s3 + $0x18] sm:$0xf] %v362
  %379 = vst [vmem:[%s3 + $0x1c] sm:$0xf] %v363
  %380 = vst [vmem:[%s3 + $0x20] sm:$0xf] %v364
  %381 = vst [vmem:[%s3 + $0x24] sm:$0xf] %v365
  %382 = vst [vmem:[%s3 + $0x28] sm:$0xf] %v366
  %383 = vst [vmem:[%s3 + $0x2c] sm:$0xf] %v367
  %384 = vst [vmem:[%s3 + $0x30] sm:$0xf] %v368
  %385 = vst [vmem:[%s3 + $0x34] sm:$0xf] %v369
  %386 = vst [vmem:[%s3 + $0x38] sm:$0xf] %v370
  %387 = vst [vmem:[%s3 + $0x3c] sm:$0xf] %v371
  // Predicated region
  $region14: #{dqn_forward.4} parent=0 // pred_check
    _
  $region15: #{dqn_forward.4} parent=0 // pred_check_branch
    %389 = sbr.rel (0) target = $region17
  $region16: #{dqn_forward.4} parent=0 // pred_region
    _
  $region17: #{dqn_forward.4} parent=0 // pred_fallthru
    _
  // Predicated region
  $region18: #{dqn_forward.4} parent=0 // pred_check
    _
  $region19: #{dqn_forward.4} parent=0 // pred_check_branch
    %391 = sbr.rel (0) target = $region21
  $region20: #{dqn_forward.4} parent=0 // pred_region
    _
  $region21: #{dqn_forward.4} parent=0 // pred_fallthru
    _

// kernel: dqn_forward.5
$region0: #{dqn_forward.5}
  #allocation0 [shape = 'u32[]', space=smem, size = 0x4, offset = 0x4, fixed_abs, tag = 'smem constant byte address 0x4 - core index']
  #allocation1 [shape = 'u32[72,128]{1,0:T(1,128)}', space=vmem, size = 0x9000, scoped, tag = 'internal scratch']
  %s0 = inlined_call_operand.vmem [shape: bf16[32,512], index: 0, kind: input, shape index: {}]
  %s1 = inlined_call_operand.vmem [shape: bf16[512,128], index: 1, kind: input, shape index: {}]
  %s2 = inlined_call_operand.vmem [shape: f32[1,128], index: 2, kind: input, shape index: {}]
  %s3 = inlined_call_operand.vmem [shape: bf16[32,128], index: 3, kind: output, shape index: {}]
  %s4 = sld [smem:[#allocation0]]
  $region22: #{dqn_forward.5} parent=0
    _
  %s6 = ssub.s32 1, %s4
  %s7 = scalar_select 0, %s6, %s4
  // Predicated region
  $region2: #{dqn_forward.5} parent=0 // pred_check
    _
  $region3: #{dqn_forward.5} parent=0 // pred_check_branch
    %9 = sbr.rel (0) target = $region5
  $region4: #{dqn_forward.5} parent=0 // pred_region
    _
  $region5: #{dqn_forward.5} parent=0 // pred_fallthru
    _
  // Predicated region
  $region6: #{dqn_forward.5} parent=0 // pred_check
    _
  $region7: #{dqn_forward.5} parent=0 // pred_check_branch
    %11 = sbr.rel (0) target = $region9
  $region8: #{dqn_forward.5} parent=0 // pred_region
    _
  $region9: #{dqn_forward.5} parent=0 // pred_fallthru
    _
  // Predicated region
  $region10: #{dqn_forward.5} parent=0 // pred_check
    _
  $region11: #{dqn_forward.5} parent=0 // pred_check_branch
    %13 = sbr.rel (0) target = $region13
  $region12: #{dqn_forward.5} parent=0 // pred_region
    _
  $region13: #{dqn_forward.5} parent=0 // pred_fallthru
    _
  %v14 = vld [vmem:[%s0] sm:$0xff]
  %v15 = vld [vmem:[%s0 + $0x8] sm:$0xff]
  %v16 = vld [vmem:[%s0 + $0x10] sm:$0xff]
  %v17 = vld [vmem:[%s0 + $0x18] sm:$0xff]
  %v18 = vld [vmem:[%s0 + $0x20] sm:$0xff]
  %v19 = vld [vmem:[%s0 + $0x28] sm:$0xff]
  %v20 = vld [vmem:[%s0 + $0x30] sm:$0xff]
  %v21 = vld [vmem:[%s0 + $0x38] sm:$0xff]
  %v22 = vld [vmem:[%s1] sm:$0xf]
  %v23 = vld [vmem:[%s1 + $0x4] sm:$0xf]
  %v24 = vld [vmem:[%s1 + $0x8] sm:$0xf]
  %v25 = vld [vmem:[%s1 + $0xc] sm:$0xf]
  %v26 = vld [vmem:[%s1 + $0x10] sm:$0xf]
  %v27 = vld [vmem:[%s1 + $0x14] sm:$0xf]
  %v28 = vld [vmem:[%s1 + $0x18] sm:$0xf]
  %v29 = vld [vmem:[%s1 + $0x1c] sm:$0xf]
  %v30 = vld [vmem:[%s1 + $0x20] sm:$0xf]
  %v31 = vld [vmem:[%s1 + $0x24] sm:$0xf]
  %v32 = vld [vmem:[%s1 + $0x28] sm:$0xf]
  %v33 = vld [vmem:[%s1 + $0x2c] sm:$0xf]
  %v34 = vld [vmem:[%s1 + $0x30] sm:$0xf]
  %v35 = vld [vmem:[%s1 + $0x34] sm:$0xf]
  %v36 = vld [vmem:[%s1 + $0x38] sm:$0xf]
  %v37 = vld [vmem:[%s1 + $0x3c] sm:$0xf]
  %v38 = vld [vmem:[%s1 + $0x40] sm:$0xf]
  %v39 = vld [vmem:[%s1 + $0x44] sm:$0xf]
  %v40 = vld [vmem:[%s1 + $0x48] sm:$0xf]
  %v41 = vld [vmem:[%s1 + $0x4c] sm:$0xf]
  %v42 = vld [vmem:[%s1 + $0x50] sm:$0xf]
  %v43 = vld [vmem:[%s1 + $0x54] sm:$0xf]
  %v44 = vld [vmem:[%s1 + $0x58] sm:$0xf]
  %v45 = vld [vmem:[%s1 + $0x5c] sm:$0xf]
  %v46 = vld [vmem:[%s1 + $0x60] sm:$0xf]
  %v47 = vld [vmem:[%s1 + $0x64] sm:$0xf]
  %v48 = vld [vmem:[%s1 + $0x68] sm:$0xf]
  %v49 = vld [vmem:[%s1 + $0x6c] sm:$0xf]
  %v50 = vld [vmem:[%s1 + $0x70] sm:$0xf]
  %v51 = vld [vmem:[%s1 + $0x74] sm:$0xf]
  %v52 = vld [vmem:[%s1 + $0x78] sm:$0xf]
  %v53 = vld [vmem:[%s1 + $0x7c] sm:$0xf]
  %v54 = vld [vmem:[%s1 + $0x80] sm:$0xf]
  %v55 = vld [vmem:[%s1 + $0x84] sm:$0xf]
  %v56 = vld [vmem:[%s1 + $0x88] sm:$0xf]
  %v57 = vld [vmem:[%s1 + $0x8c] sm:$0xf]
  %v58 = vld [vmem:[%s1 + $0x90] sm:$0xf]
  %v59 = vld [vmem:[%s1 + $0x94] sm:$0xf]
  %v60 = vld [vmem:[%s1 + $0x98] sm:$0xf]
  %v61 = vld [vmem:[%s1 + $0x9c] sm:$0xf]
  %v62 = vld [vmem:[%s1 + $0xa0] sm:$0xf]
  %v63 = vld [vmem:[%s1 + $0xa4] sm:$0xf]
  %v64 = vld [vmem:[%s1 + $0xa8] sm:$0xf]
  %v65 = vld [vmem:[%s1 + $0xac] sm:$0xf]
  %v66 = vld [vmem:[%s1 + $0xb0] sm:$0xf]
  %v67 = vld [vmem:[%s1 + $0xb4] sm:$0xf]
  %v68 = vld [vmem:[%s1 + $0xb8] sm:$0xf]
  %v69 = vld [vmem:[%s1 + $0xbc] sm:$0xf]
  %v70 = vld [vmem:[%s1 + $0xc0] sm:$0xf]
  %v71 = vld [vmem:[%s1 + $0xc4] sm:$0xf]
  %v72 = vld [vmem:[%s1 + $0xc8] sm:$0xf]
  %v73 = vld [vmem:[%s1 + $0xcc] sm:$0xf]
  %v74 = vld [vmem:[%s1 + $0xd0] sm:$0xf]
  %v75 = vld [vmem:[%s1 + $0xd4] sm:$0xf]
  %v76 = vld [vmem:[%s1 + $0xd8] sm:$0xf]
  %v77 = vld [vmem:[%s1 + $0xdc] sm:$0xf]
  %v78 = vld [vmem:[%s1 + $0xe0] sm:$0xf]
  %v79 = vld [vmem:[%s1 + $0xe4] sm:$0xf]
  %v80 = vld [vmem:[%s1 + $0xe8] sm:$0xf]
  %v81 = vld [vmem:[%s1 + $0xec] sm:$0xf]
  %v82 = vld [vmem:[%s1 + $0xf0] sm:$0xf]
  %v83 = vld [vmem:[%s1 + $0xf4] sm:$0xf]
  %v84 = vld [vmem:[%s1 + $0xf8] sm:$0xf]
  %v85 = vld [vmem:[%s1 + $0xfc] sm:$0xf]
  %v86 = vld [vmem:[%s2] sm:$0x1]
  %v88 = vperm.slane %v86, 0
  %v98 = vunpack.c.l.b16 %v14
  %v99 = vunpack.c.h.b16 %v14
  %v100 = vunpack.c.l.b16 %v15
  %v101 = vunpack.c.h.b16 %v15
  %v102 = vunpack.c.l.b16 %v16
  %v103 = vunpack.c.h.b16 %v16
  %v104 = vunpack.c.l.b16 %v17
  %v105 = vunpack.c.h.b16 %v17
  %v106 = vunpack.c.l.b16 %v18
  %v107 = vunpack.c.h.b16 %v18
  %v108 = vunpack.c.l.b16 %v19
  %v109 = vunpack.c.h.b16 %v19
  %v110 = vunpack.c.l.b16 %v20
  %v111 = vunpack.c.h.b16 %v20
  %v112 = vunpack.c.l.b16 %v21
  %v113 = vunpack.c.h.b16 %v21
  %v114 = vpack.c.b16 %v102, %v98
  %v115 = vpack.c.b16 %v103, %v99
  %v116 = vpack.c.b16 %v104, %v100
  %v117 = vpack.c.b16 %v105, %v101
  %v118 = vpack.c.b16 %v110, %v106
  %v119 = vpack.c.b16 %v111, %v107
  %v120 = vpack.c.b16 %v112, %v108
  %v121 = vpack.c.b16 %v113, %v109
  %v194 = vunpack.c.l.b16 %v22
  %v195 = vunpack.c.l.b16 %v23
  %v196 = vunpack.c.l.b16 %v24
  %v197 = vunpack.c.l.b16 %v25
  %v198 = vunpack.c.l.b16 %v26
  %v199 = vunpack.c.l.b16 %v27
  %v200 = vunpack.c.l.b16 %v28
  %v201 = vunpack.c.l.b16 %v29
  %v202 = vunpack.c.l.b16 %v30
  %v203 = vunpack.c.l.b16 %v31
  %v204 = vunpack.c.l.b16 %v32
  %v205 = vunpack.c.l.b16 %v33
  %v206 = vunpack.c.l.b16 %v34
  %v207 = vunpack.c.l.b16 %v35
  %v208 = vunpack.c.l.b16 %v36
  %v209 = vunpack.c.l.b16 %v37
  %v210 = vunpack.c.l.b16 %v38
  %v211 = vunpack.c.l.b16 %v39
  %v212 = vunpack.c.l.b16 %v40
  %v213 = vunpack.c.l.b16 %v41
  %v214 = vunpack.c.l.b16 %v42
  %v215 = vunpack.c.l.b16 %v43
  %v216 = vunpack.c.l.b16 %v44
  %v217 = vunpack.c.l.b16 %v45
  %v218 = vunpack.c.l.b16 %v46
  %v219 = vunpack.c.l.b16 %v47
  %v220 = vunpack.c.l.b16 %v48
  %v221 = vunpack.c.l.b16 %v49
  %v222 = vunpack.c.l.b16 %v50
  %v223 = vunpack.c.l.b16 %v51
  %v224 = vunpack.c.l.b16 %v52
  %v225 = vunpack.c.l.b16 %v53
  %v226 = vunpack.c.l.b16 %v54
  %v227 = vunpack.c.l.b16 %v55
  %v228 = vunpack.c.l.b16 %v56
  %v229 = vunpack.c.l.b16 %v57
  %v230 = vunpack.c.l.b16 %v58
  %v231 = vunpack.c.l.b16 %v59
  %v232 = vunpack.c.l.b16 %v60
  %v233 = vunpack.c.l.b16 %v61
  %v234 = vunpack.c.l.b16 %v62
  %v235 = vunpack.c.l.b16 %v63
  %v236 = vunpack.c.l.b16 %v64
  %v237 = vunpack.c.l.b16 %v65
  %v238 = vunpack.c.l.b16 %v66
  %v239 = vunpack.c.l.b16 %v67
  %v240 = vunpack.c.l.b16 %v68
  %v241 = vunpack.c.l.b16 %v69
  %v242 = vunpack.c.l.b16 %v70
  %v243 = vunpack.c.l.b16 %v71
  %v244 = vunpack.c.l.b16 %v72
  %v245 = vunpack.c.l.b16 %v73
  %v246 = vunpack.c.l.b16 %v74
  %v247 = vunpack.c.l.b16 %v75
  %v248 = vunpack.c.l.b16 %v76
  %v249 = vunpack.c.l.b16 %v77
  %v250 = vunpack.c.l.b16 %v78
  %v251 = vunpack.c.l.b16 %v79
  %v252 = vunpack.c.l.b16 %v80
  %v253 = vunpack.c.l.b16 %v81
  %v254 = vunpack.c.l.b16 %v82
  %v255 = vunpack.c.l.b16 %v83
  %v256 = vunpack.c.l.b16 %v84
  %v257 = vunpack.c.l.b16 %v85
  %v258 = vpack.c.b16 %v195, %v194
  %v259 = vpack.c.b16 %v197, %v196
  %v260 = vpack.c.b16 %v199, %v198
  %v261 = vpack.c.b16 %v201, %v200
  %v262 = vpack.c.b16 %v203, %v202
  %v263 = vpack.c.b16 %v205, %v204
  %v264 = vpack.c.b16 %v207, %v206
  %v265 = vpack.c.b16 %v209, %v208
  %v266 = vpack.c.b16 %v211, %v210
  %v267 = vpack.c.b16 %v213, %v212
  %v268 = vpack.c.b16 %v215, %v214
  %v269 = vpack.c.b16 %v217, %v216
  %v270 = vpack.c.b16 %v219, %v218
  %v271 = vpack.c.b16 %v221, %v220
  %v272 = vpack.c.b16 %v223, %v222
  %v273 = vpack.c.b16 %v225, %v224
  %v274 = vpack.c.b16 %v227, %v226
  %v275 = vpack.c.b16 %v229, %v228
  %v276 = vpack.c.b16 %v231, %v230
  %v277 = vpack.c.b16 %v233, %v232
  %v278 = vpack.c.b16 %v235, %v234
  %v279 = vpack.c.b16 %v237, %v236
  %v280 = vpack.c.b16 %v239, %v238
  %v281 = vpack.c.b16 %v241, %v240
  %v282 = vpack.c.b16 %v243, %v242
  %v283 = vpack.c.b16 %v245, %v244
  %v284 = vpack.c.b16 %v247, %v246
  %v285 = vpack.c.b16 %v249, %v248
  %v286 = vpack.c.b16 %v251, %v250
  %v287 = vpack.c.b16 %v253, %v252
  %v288 = vpack.c.b16 %v255, %v254
  %v289 = vpack.c.b16 %v257, %v256
  %322 = vmatpush.bf16.msra.mxu0 %v265
  %323 = vmatpush.bf16.msra.mxu0 %v264
  %324 = vmatpush.bf16.msra.mxu0 %v263
  %325 = vmatpush.bf16.msra.mxu0 %v262
  %326 = vmatpush.bf16.msra.mxu0 %v261
  %327 = vmatpush.bf16.msra.mxu0 %v260
  %328 = vmatpush.bf16.msra.mxu0 %v259
  %329 = vmatpush.bf16.msra.mxu0 %v258
  %330 = vmatmul.bf16.gmra.mxu0 %v114
  %v331 = vpop.f32.mrf.mxu0
  %v332 = vadd.f32 %v88, %v331
  %v333 = vpop.f32.mrf.mxu0
  %v334 = vadd.f32 %v88, %v333
  %335 = vmatmul.bf16.gmra.mxu0 %v118
  %v336 = vpop.f32.mrf.mxu0
  %v337 = vadd.f32 %v88, %v336
  %v338 = vpop.f32.mrf.mxu0
  %v339 = vadd.f32 %v88, %v338
  %340 = vdwg.mxu0
  %341 = vmatpush.bf16.msra.mxu0 %v273
  %342 = vmatpush.bf16.msra.mxu0 %v272
  %343 = vmatpush.bf16.msra.mxu0 %v271
  %344 = vmatpush.bf16.msra.mxu0 %v270
  %345 = vmatpush.bf16.msra.mxu0 %v269
  %346 = vmatpush.bf16.msra.mxu0 %v268
  %347 = vmatpush.bf16.msra.mxu0 %v267
  %348 = vmatpush.bf16.msra.mxu0 %v266
  %349 = vmatmul.bf16.gmra.mxu0 %v115
  %v350 = vpop.f32.mrf.mxu0
  %v351 = vadd.f32 %v332, %v350
  %v352 = vpop.f32.mrf.mxu0
  %v353 = vadd.f32 %v334, %v352
  %354 = vmatmul.bf16.gmra.mxu0 %v119
  %v355 = vpop.f32.mrf.mxu0
  %v356 = vadd.f32 %v337, %v355
  %v357 = vpop.f32.mrf.mxu0
  %v358 = vadd.f32 %v339, %v357
  %359 = vdwg.mxu0
  %360 = vmatpush.bf16.msra.mxu0 %v281
  %361 = vmatpush.bf16.msra.mxu0 %v280
  %362 = vmatpush.bf16.msra.mxu0 %v279
  %363 = vmatpush.bf16.msra.mxu0 %v278
  %364 = vmatpush.bf16.msra.mxu0 %v277
  %365 = vmatpush.bf16.msra.mxu0 %v276
  %366 = vmatpush.bf16.msra.mxu0 %v275
  %367 = vmatpush.bf16.msra.mxu0 %v274
  %368 = vmatmul.bf16.gmra.mxu0 %v116
  %v369 = vpop.f32.mrf.mxu0
  %v370 = vadd.f32 %v351, %v369
  %v371 = vpop.f32.mrf.mxu0
  %v372 = vadd.f32 %v353, %v371
  %373 = vmatmul.bf16.gmra.mxu0 %v120
  %v374 = vpop.f32.mrf.mxu0
  %v375 = vadd.f32 %v356, %v374
  %v376 = vpop.f32.mrf.mxu0
  %v377 = vadd.f32 %v358, %v376
  %378 = vdwg.mxu0
  %379 = vmatpush.bf16.msra.mxu0 %v289
  %380 = vmatpush.bf16.msra.mxu0 %v288
  %381 = vmatpush.bf16.msra.mxu0 %v287
  %382 = vmatpush.bf16.msra.mxu0 %v286
  %383 = vmatpush.bf16.msra.mxu0 %v285
  %384 = vmatpush.bf16.msra.mxu0 %v284
  %385 = vmatpush.bf16.msra.mxu0 %v283
  %386 = vmatpush.bf16.msra.mxu0 %v282
  %387 = vmatmul.bf16.gmra.mxu0 %v117
  %v388 = vpop.f32.mrf.mxu0
  %v389 = vadd.f32 %v370, %v388
  %v390 = vpop.f32.mrf.mxu0
  %v391 = vadd.f32 %v372, %v390
  %392 = vmatmul.bf16.gmra.mxu0 %v121
  %v393 = vpop.f32.mrf.mxu0
  %v394 = vadd.f32 %v375, %v393
  %v395 = vpop.f32.mrf.mxu0
  %v396 = vadd.f32 %v377, %v395
  %397 = vdwg.mxu0
  %v398 = vmax.f32 %v389, 0.0
  %v399 = vmax.f32 %v391, 0.0
  %v400 = vmax.f32 %v394, 0.0
  %v401 = vmax.f32 %v396, 0.0
  %v402 = vpack.c.bf16 %v398, %v398
  %v403 = vpack.c.bf16 %v399, %v399
  %v404 = vpack.c.bf16 %v400, %v400
  %v405 = vpack.c.bf16 %v401, %v401
  %406 = vst [vmem:[%s3] sm:$0xf] %v402
  %407 = vst [vmem:[%s3 + $0x4] sm:$0xf] %v403
  %408 = vst [vmem:[%s3 + $0x8] sm:$0xf] %v404
  %409 = vst [vmem:[%s3 + $0xc] sm:$0xf] %v405
  // Predicated region
  $region14: #{dqn_forward.5} parent=0 // pred_check
    _
  $region15: #{dqn_forward.5} parent=0 // pred_check_branch
    %411 = sbr.rel (0) target = $region17
  $region16: #{dqn_forward.5} parent=0 // pred_region
    _
  $region17: #{dqn_forward.5} parent=0 // pred_fallthru
    _
  // Predicated region
  $region18: #{dqn_forward.5} parent=0 // pred_check
    _
  $region19: #{dqn_forward.5} parent=0 // pred_check_branch
    %413 = sbr.rel (0) target = $region21
  $region20: #{dqn_forward.5} parent=0 // pred_region
    _
  $region21: #{dqn_forward.5} parent=0 // pred_fallthru
    _

// kernel: dqn_forward.6
$region0: #{dqn_forward.6}
  #allocation0 [shape = 'u32[]', space=smem, size = 0x4, offset = 0x4, fixed_abs, tag = 'smem constant byte address 0x4 - core index']
  #allocation1 [shape = 'u32[72,128]{1,0:T(1,128)}', space=vmem, size = 0x9000, scoped, tag = 'internal scratch']
  %s0 = inlined_call_operand.vmem [shape: bf16[16,576], index: 0, kind: input, shape index: {}]
  %s1 = inlined_call_operand.vmem [shape: bf16[576,128], index: 1, kind: input, shape index: {}]
  %s2 = inlined_call_operand.vmem [shape: f32[1,128], index: 2, kind: input, shape index: {}]
  %s3 = inlined_call_operand.vmem [shape: bf16[16,128], index: 3, kind: output, shape index: {}]
  %s4 = sld [smem:[#allocation0]]
  $region22: #{dqn_forward.6} parent=0
    _
  %s6 = ssub.s32 1, %s4
  %s7 = scalar_select 0, %s6, %s4
  // Predicated region
  $region2: #{dqn_forward.6} parent=0 // pred_check
    _
  $region3: #{dqn_forward.6} parent=0 // pred_check_branch
    %9 = sbr.rel (0) target = $region5
  $region4: #{dqn_forward.6} parent=0 // pred_region
    _
  $region5: #{dqn_forward.6} parent=0 // pred_fallthru
    _
  // Predicated region
  $region6: #{dqn_forward.6} parent=0 // pred_check
    _
  $region7: #{dqn_forward.6} parent=0 // pred_check_branch
    %11 = sbr.rel (0) target = $region9
  $region8: #{dqn_forward.6} parent=0 // pred_region
    _
  $region9: #{dqn_forward.6} parent=0 // pred_fallthru
    _
  // Predicated region
  $region10: #{dqn_forward.6} parent=0 // pred_check
    _
  $region11: #{dqn_forward.6} parent=0 // pred_check_branch
    %13 = sbr.rel (0) target = $region13
  $region12: #{dqn_forward.6} parent=0 // pred_region
    _
  $region13: #{dqn_forward.6} parent=0 // pred_fallthru
    _
  %v15 = vld [vmem:[%s0] sm:$0xff]
  %v16 = vld [vmem:[%s0 + $0x8] sm:$0xff]
  %v17 = vld [vmem:[%s0 + $0x10] sm:$0xf]
  %v18 = vld [vmem:[%s0 + $0x14] sm:$0xff]
  %v19 = vld [vmem:[%s0 + $0x1c] sm:$0xff]
  %v20 = vld [vmem:[%s0 + $0x24] sm:$0xf]
  %v21 = vld [vmem:[%s1] sm:$0xf]
  %v22 = vld [vmem:[%s1 + $0x4] sm:$0xf]
  %v23 = vld [vmem:[%s1 + $0x8] sm:$0xf]
  %v24 = vld [vmem:[%s1 + $0xc] sm:$0xf]
  %v25 = vld [vmem:[%s1 + $0x10] sm:$0xf]
  %v26 = vld [vmem:[%s1 + $0x14] sm:$0xf]
  %v27 = vld [vmem:[%s1 + $0x18] sm:$0xf]
  %v28 = vld [vmem:[%s1 + $0x1c] sm:$0xf]
  %v29 = vld [vmem:[%s1 + $0x20] sm:$0xf]
  %v30 = vld [vmem:[%s1 + $0x24] sm:$0xf]
  %v31 = vld [vmem:[%s1 + $0x28] sm:$0xf]
  %v32 = vld [vmem:[%s1 + $0x2c] sm:$0xf]
  %v33 = vld [vmem:[%s1 + $0x30] sm:$0xf]
  %v34 = vld [vmem:[%s1 + $0x34] sm:$0xf]
  %v35 = vld [vmem:[%s1 + $0x38] sm:$0xf]
  %v36 = vld [vmem:[%s1 + $0x3c] sm:$0xf]
  %v37 = vld [vmem:[%s1 + $0x40] sm:$0xf]
  %v38 = vld [vmem:[%s1 + $0x44] sm:$0xf]
  %v39 = vld [vmem:[%s1 + $0x48] sm:$0xf]
  %v40 = vld [vmem:[%s1 + $0x4c] sm:$0xf]
  %v41 = vld [vmem:[%s1 + $0x50] sm:$0xf]
  %v42 = vld [vmem:[%s1 + $0x54] sm:$0xf]
  %v43 = vld [vmem:[%s1 + $0x58] sm:$0xf]
  %v44 = vld [vmem:[%s1 + $0x5c] sm:$0xf]
  %v45 = vld [vmem:[%s1 + $0x60] sm:$0xf]
  %v46 = vld [vmem:[%s1 + $0x64] sm:$0xf]
  %v47 = vld [vmem:[%s1 + $0x68] sm:$0xf]
  %v48 = vld [vmem:[%s1 + $0x6c] sm:$0xf]
  %v49 = vld [vmem:[%s1 + $0x70] sm:$0xf]
  %v50 = vld [vmem:[%s1 + $0x74] sm:$0xf]
  %v51 = vld [vmem:[%s1 + $0x78] sm:$0xf]
  %v52 = vld [vmem:[%s1 + $0x7c] sm:$0xf]
  %v53 = vld [vmem:[%s1 + $0x80] sm:$0xf]
  %v54 = vld [vmem:[%s1 + $0x84] sm:$0xf]
  %v55 = vld [vmem:[%s1 + $0x88] sm:$0xf]
  %v56 = vld [vmem:[%s1 + $0x8c] sm:$0xf]
  %v57 = vld [vmem:[%s1 + $0x90] sm:$0xf]
  %v58 = vld [vmem:[%s1 + $0x94] sm:$0xf]
  %v59 = vld [vmem:[%s1 + $0x98] sm:$0xf]
  %v60 = vld [vmem:[%s1 + $0x9c] sm:$0xf]
  %v61 = vld [vmem:[%s1 + $0xa0] sm:$0xf]
  %v62 = vld [vmem:[%s1 + $0xa4] sm:$0xf]
  %v63 = vld [vmem:[%s1 + $0xa8] sm:$0xf]
  %v64 = vld [vmem:[%s1 + $0xac] sm:$0xf]
  %v65 = vld [vmem:[%s1 + $0xb0] sm:$0xf]
  %v66 = vld [vmem:[%s1 + $0xb4] sm:$0xf]
  %v67 = vld [vmem:[%s1 + $0xb8] sm:$0xf]
  %v68 = vld [vmem:[%s1 + $0xbc] sm:$0xf]
  %v69 = vld [vmem:[%s1 + $0xc0] sm:$0xf]
  %v70 = vld [vmem:[%s1 + $0xc4] sm:$0xf]
  %v71 = vld [vmem:[%s1 + $0xc8] sm:$0xf]
  %v72 = vld [vmem:[%s1 + $0xcc] sm:$0xf]
  %v73 = vld [vmem:[%s1 + $0xd0] sm:$0xf]
  %v74 = vld [vmem:[%s1 + $0xd4] sm:$0xf]
  %v75 = vld [vmem:[%s1 + $0xd8] sm:$0xf]
  %v76 = vld [vmem:[%s1 + $0xdc] sm:$0xf]
  %v77 = vld [vmem:[%s1 + $0xe0] sm:$0xf]
  %v78 = vld [vmem:[%s1 + $0xe4] sm:$0xf]
  %v79 = vld [vmem:[%s1 + $0xe8] sm:$0xf]
  %v80 = vld [vmem:[%s1 + $0xec] sm:$0xf]
  %v81 = vld [vmem:[%s1 + $0xf0] sm:$0xf]
  %v82 = vld [vmem:[%s1 + $0xf4] sm:$0xf]
  %v83 = vld [vmem:[%s1 + $0xf8] sm:$0xf]
  %v84 = vld [vmem:[%s1 + $0xfc] sm:$0xf]
  %v85 = vld [vmem:[%s1 + $0x100] sm:$0xf]
  %v86 = vld [vmem:[%s1 + $0x104] sm:$0xf]
  %v87 = vld [vmem:[%s1 + $0x108] sm:$0xf]
  %v88 = vld [vmem:[%s1 + $0x10c] sm:$0xf]
  %v89 = vld [vmem:[%s1 + $0x110] sm:$0xf]
  %v90 = vld [vmem:[%s1 + $0x114] sm:$0xf]
  %v91 = vld [vmem:[%s1 + $0x118] sm:$0xf]
  %v92 = vld [vmem:[%s1 + $0x11c] sm:$0xf]
  %v93 = vld [vmem:[%s2] sm:$0x1]
  %v95 = vperm.slane %v93, 0
  %v103 = vunpack.c.l.b16 %v15
  %v104 = vunpack.c.h.b16 %v15
  %v105 = vunpack.c.l.b16 %v16
  %v106 = vunpack.c.h.b16 %v16
  %v107 = vunpack.c.l.b16 %v17
  %v108 = vunpack.c.l.b16 %v18
  %v109 = vunpack.c.h.b16 %v18
  %v110 = vunpack.c.l.b16 %v19
  %v111 = vunpack.c.h.b16 %v19
  %v112 = vunpack.c.l.b16 %v20
  %v113 = vpack.c.b16 %v108, %v103
  %v114 = vpack.c.b16 %v109, %v104
  %v115 = vpack.c.b16 %v110, %v105
  %v116 = vpack.c.b16 %v111, %v106
  %v117 = vpack.c.b16 %v112, %v107
  %v194 = vunpack.c.l.b16 %v21
  %v195 = vunpack.c.l.b16 %v22
  %v196 = vunpack.c.l.b16 %v23
  %v197 = vunpack.c.l.b16 %v24
  %v198 = vunpack.c.l.b16 %v25
  %v199 = vunpack.c.l.b16 %v26
  %v200 = vunpack.c.l.b16 %v27
  %v201 = vunpack.c.l.b16 %v28
  %v202 = vunpack.c.l.b16 %v29
  %v203 = vunpack.c.l.b16 %v30
  %v204 = vunpack.c.l.b16 %v31
  %v205 = vunpack.c.l.b16 %v32
  %v206 = vunpack.c.l.b16 %v33
  %v207 = vunpack.c.l.b16 %v34
  %v208 = vunpack.c.l.b16 %v35
  %v209 = vunpack.c.l.b16 %v36
  %v210 = vunpack.c.l.b16 %v37
  %v211 = vunpack.c.l.b16 %v38
  %v212 = vunpack.c.l.b16 %v39
  %v213 = vunpack.c.l.b16 %v40
  %v214 = vunpack.c.l.b16 %v41
  %v215 = vunpack.c.l.b16 %v42
  %v216 = vunpack.c.l.b16 %v43
  %v217 = vunpack.c.l.b16 %v44
  %v218 = vunpack.c.l.b16 %v45
  %v219 = vunpack.c.l.b16 %v46
  %v220 = vunpack.c.l.b16 %v47
  %v221 = vunpack.c.l.b16 %v48
  %v222 = vunpack.c.l.b16 %v49
  %v223 = vunpack.c.l.b16 %v50
  %v224 = vunpack.c.l.b16 %v51
  %v225 = vunpack.c.l.b16 %v52
  %v226 = vunpack.c.l.b16 %v53
  %v227 = vunpack.c.l.b16 %v54
  %v228 = vunpack.c.l.b16 %v55
  %v229 = vunpack.c.l.b16 %v56
  %v230 = vunpack.c.l.b16 %v57
  %v231 = vunpack.c.l.b16 %v58
  %v232 = vunpack.c.l.b16 %v59
  %v233 = vunpack.c.l.b16 %v60
  %v234 = vunpack.c.l.b16 %v61
  %v235 = vunpack.c.l.b16 %v62
  %v236 = vunpack.c.l.b16 %v63
  %v237 = vunpack.c.l.b16 %v64
  %v238 = vunpack.c.l.b16 %v65
  %v239 = vunpack.c.l.b16 %v66
  %v240 = vunpack.c.l.b16 %v67
  %v241 = vunpack.c.l.b16 %v68
  %v242 = vunpack.c.l.b16 %v69
  %v243 = vunpack.c.l.b16 %v70
  %v244 = vunpack.c.l.b16 %v71
  %v245 = vunpack.c.l.b16 %v72
  %v246 = vunpack.c.l.b16 %v73
  %v247 = vunpack.c.l.b16 %v74
  %v248 = vunpack.c.l.b16 %v75
  %v249 = vunpack.c.l.b16 %v76
  %v250 = vunpack.c.l.b16 %v77
  %v251 = vunpack.c.l.b16 %v78
  %v252 = vunpack.c.l.b16 %v79
  %v253 = vunpack.c.l.b16 %v80
  %v254 = vunpack.c.l.b16 %v81
  %v255 = vunpack.c.l.b16 %v82
  %v256 = vunpack.c.l.b16 %v83
  %v257 = vunpack.c.l.b16 %v84
  %v258 = vunpack.c.l.b16 %v85
  %v259 = vunpack.c.l.b16 %v86
  %v260 = vunpack.c.l.b16 %v87
  %v261 = vunpack.c.l.b16 %v88
  %v262 = vunpack.c.l.b16 %v89
  %v263 = vunpack.c.l.b16 %v90
  %v264 = vunpack.c.l.b16 %v91
  %v265 = vunpack.c.l.b16 %v92
  %v266 = vpack.c.b16 %v195, %v194
  %v267 = vpack.c.b16 %v197, %v196
  %v268 = vpack.c.b16 %v199, %v198
  %v269 = vpack.c.b16 %v201, %v200
  %v270 = vpack.c.b16 %v203, %v202
  %v271 = vpack.c.b16 %v205, %v204
  %v272 = vpack.c.b16 %v207, %v206
  %v273 = vpack.c.b16 %v209, %v208
  %v274 = vpack.c.b16 %v211, %v210
  %v275 = vpack.c.b16 %v213, %v212
  %v276 = vpack.c.b16 %v215, %v214
  %v277 = vpack.c.b16 %v217, %v216
  %v278 = vpack.c.b16 %v219, %v218
  %v279 = vpack.c.b16 %v221, %v220
  %v280 = vpack.c.b16 %v223, %v222
  %v281 = vpack.c.b16 %v225, %v224
  %v282 = vpack.c.b16 %v227, %v226
  %v283 = vpack.c.b16 %v229, %v228
  %v284 = vpack.c.b16 %v231, %v230
  %v285 = vpack.c.b16 %v233, %v232
  %v286 = vpack.c.b16 %v235, %v234
  %v287 = vpack.c.b16 %v237, %v236
  %v288 = vpack.c.b16 %v239, %v238
  %v289 = vpack.c.b16 %v241, %v240
  %v290 = vpack.c.b16 %v243, %v242
  %v291 = vpack.c.b16 %v245, %v244
  %v292 = vpack.c.b16 %v247, %v246
  %v293 = vpack.c.b16 %v249, %v248
  %v294 = vpack.c.b16 %v251, %v250
  %v295 = vpack.c.b16 %v253, %v252
  %v296 = vpack.c.b16 %v255, %v254
  %v297 = vpack.c.b16 %v257, %v256
  %v298 = vpack.c.b16 %v259, %v258
  %v299 = vpack.c.b16 %v261, %v260
  %v300 = vpack.c.b16 %v263, %v262
  %v301 = vpack.c.b16 %v265, %v264
  %vm338 = vcmask 523264
  %v340 = vsel %vm338, %v117, 0
  %342 = vmatpush.bf16.msra.mxu0 %v273
  %343 = vmatpush.bf16.msra.mxu0 %v272
  %344 = vmatpush.bf16.msra.mxu0 %v271
  %345 = vmatpush.bf16.msra.mxu0 %v270
  %346 = vmatpush.bf16.msra.mxu0 %v269
  %347 = vmatpush.bf16.msra.mxu0 %v268
  %348 = vmatpush.bf16.msra.mxu0 %v267
  %349 = vmatpush.bf16.msra.mxu0 %v266
  %350 = vmatmul.bf16.gmra.mxu0 %v113
  %v351 = vpop.f32.mrf.mxu0
  %v352 = vadd.f32 %v95, %v351
  %v353 = vpop.f32.mrf.mxu0
  %v354 = vadd.f32 %v95, %v353
  %355 = vdwg.mxu0
  %356 = vmatpush.bf16.msra.mxu0 %v281
  %357 = vmatpush.bf16.msra.mxu0 %v280
  %358 = vmatpush.bf16.msra.mxu0 %v279
  %359 = vmatpush.bf16.msra.mxu0 %v278
  %360 = vmatpush.bf16.msra.mxu0 %v277
  %361 = vmatpush.bf16.msra.mxu0 %v276
  %362 = vmatpush.bf16.msra.mxu0 %v275
  %363 = vmatpush.bf16.msra.mxu0 %v274
  %364 = vmatmul.bf16.gmra.mxu0 %v114
  %v365 = vpop.f32.mrf.mxu0
  %v366 = vadd.f32 %v352, %v365
  %v367 = vpop.f32.mrf.mxu0
  %v368 = vadd.f32 %v354, %v367
  %369 = vdwg.mxu0
  %370 = vmatpush.bf16.msra.mxu0 %v289
  %371 = vmatpush.bf16.msra.mxu0 %v288
  %372 = vmatpush.bf16.msra.mxu0 %v287
  %373 = vmatpush.bf16.msra.mxu0 %v286
  %374 = vmatpush.bf16.msra.mxu0 %v285
  %375 = vmatpush.bf16.msra.mxu0 %v284
  %376 = vmatpush.bf16.msra.mxu0 %v283
  %377 = vmatpush.bf16.msra.mxu0 %v282
  %378 = vmatmul.bf16.gmra.mxu0 %v115
  %v379 = vpop.f32.mrf.mxu0
  %v380 = vadd.f32 %v366, %v379
  %v381 = vpop.f32.mrf.mxu0
  %v382 = vadd.f32 %v368, %v381
  %383 = vdwg.mxu0
  %384 = vmatpush.bf16.msra.mxu0 %v297
  %385 = vmatpush.bf16.msra.mxu0 %v296
  %386 = vmatpush.bf16.msra.mxu0 %v295
  %387 = vmatpush.bf16.msra.mxu0 %v294
  %388 = vmatpush.bf16.msra.mxu0 %v293
  %389 = vmatpush.bf16.msra.mxu0 %v292
  %390 = vmatpush.bf16.msra.mxu0 %v291
  %391 = vmatpush.bf16.msra.mxu0 %v290
  %392 = vmatmul.bf16.gmra.mxu0 %v116
  %v393 = vpop.f32.mrf.mxu0
  %v394 = vadd.f32 %v380, %v393
  %v395 = vpop.f32.mrf.mxu0
  %v396 = vadd.f32 %v382, %v395
  %397 = vdwg.mxu0
  %398 = vmatpush.bf16.msra.mxu0 0
  %399 = vmatpush.bf16.msra.mxu0 0
  %400 = vmatpush.bf16.msra.mxu0 0
  %401 = vmatpush.bf16.msra.mxu0 0
  %402 = vmatpush.bf16.msra.mxu0 %v301
  %403 = vmatpush.bf16.msra.mxu0 %v300
  %404 = vmatpush.bf16.msra.mxu0 %v299
  %405 = vmatpush.bf16.msra.mxu0 %v298
  %406 = vmatmul.bf16.gmra.mxu0 %v340
  %v407 = vpop.f32.mrf.mxu0
  %v408 = vadd.f32 %v394, %v407
  %v409 = vpop.f32.mrf.mxu0
  %v410 = vadd.f32 %v396, %v409
  %411 = vdwg.mxu0
  %v412 = vmax.f32 %v408, 0.0
  %v413 = vmax.f32 %v410, 0.0
  %v414 = vpack.c.bf16 %v412, %v412
  %v415 = vpack.c.bf16 %v413, %v413
  %416 = vst [vmem:[%s3] sm:$0xf] %v414
  %417 = vst [vmem:[%s3 + $0x4] sm:$0xf] %v415
  // Predicated region
  $region14: #{dqn_forward.6} parent=0 // pred_check
    _
  $region15: #{dqn_forward.6} parent=0 // pred_check_branch
    %419 = sbr.rel (0) target = $region17
  $region16: #{dqn_forward.6} parent=0 // pred_region
    _
  $region17: #{dqn_forward.6} parent=0 // pred_fallthru
    _
  // Predicated region
  $region18: #{dqn_forward.6} parent=0 // pred_check
    _
  $region19: #{dqn_forward.6} parent=0 // pred_check_branch
    %421 = sbr.rel (0) target = $region21
  $region20: #{dqn_forward.6} parent=0 // pred_region
    _
  $region21: #{dqn_forward.6} parent=0 // pred_fallthru
    _

// kernel: dqn_forward.7
$region0: #{dqn_forward.7}
  #allocation0 [shape = 'u32[]', space=smem, size = 0x4, offset = 0x4, fixed_abs, tag = 'smem constant byte address 0x4 - core index']
  #allocation1 [shape = 'u32[72,128]{1,0:T(1,128)}', space=vmem, size = 0x9000, scoped, tag = 'internal scratch']
  %s0 = inlined_call_operand.vmem [shape: bf16[16,128], index: 0, kind: input, shape index: {}]
  %s1 = inlined_call_operand.vmem [shape: bf16[128,512], index: 1, kind: input, shape index: {}]
  %s2 = inlined_call_operand.vmem [shape: f32[1,512], index: 2, kind: input, shape index: {}]
  %s3 = inlined_call_operand.vmem [shape: bf16[512,128], index: 3, kind: input, shape index: {}]
  %s4 = inlined_call_operand.vmem [shape: f32[1,128], index: 4, kind: input, shape index: {}]
  %s5 = inlined_call_operand.vmem [shape: f32[16,128], index: 5, kind: output, shape index: {}]
  %s6 = sld [smem:[#allocation0]]
  $region30: #{dqn_forward.7} parent=0
    _
  %s8 = ssub.s32 1, %s6
  %s9 = scalar_select 0, %s8, %s6
  // Predicated region
  $region2: #{dqn_forward.7} parent=0 // pred_check
    _
  $region3: #{dqn_forward.7} parent=0 // pred_check_branch
    %11 = sbr.rel (0) target = $region5
  $region4: #{dqn_forward.7} parent=0 // pred_region
    _
  $region5: #{dqn_forward.7} parent=0 // pred_fallthru
    _
  // Predicated region
  $region6: #{dqn_forward.7} parent=0 // pred_check
    _
  $region7: #{dqn_forward.7} parent=0 // pred_check_branch
    %13 = sbr.rel (0) target = $region9
  $region8: #{dqn_forward.7} parent=0 // pred_region
    _
  $region9: #{dqn_forward.7} parent=0 // pred_fallthru
    _
  // Predicated region
  $region10: #{dqn_forward.7} parent=0 // pred_check
    _
  $region11: #{dqn_forward.7} parent=0 // pred_check_branch
    %15 = sbr.rel (0) target = $region13
  $region12: #{dqn_forward.7} parent=0 // pred_region
    _
  $region13: #{dqn_forward.7} parent=0 // pred_fallthru
    _
  // Predicated region
  $region14: #{dqn_forward.7} parent=0 // pred_check
    _
  $region15: #{dqn_forward.7} parent=0 // pred_check_branch
    %17 = sbr.rel (0) target = $region17
  $region16: #{dqn_forward.7} parent=0 // pred_region
    _
  $region17: #{dqn_forward.7} parent=0 // pred_fallthru
    _
  // Predicated region
  $region18: #{dqn_forward.7} parent=0 // pred_check
    _
  $region19: #{dqn_forward.7} parent=0 // pred_check_branch
    %19 = sbr.rel (0) target = $region21
  $region20: #{dqn_forward.7} parent=0 // pred_region
    _
  $region21: #{dqn_forward.7} parent=0 // pred_fallthru
    _
  %v20 = vld [vmem:[%s0] sm:$0xf]
  %v21 = vld [vmem:[%s0 + $0x4] sm:$0xf]
  %v22 = vld [vmem:[%s1] sm:$0xff]
  %v23 = vld [vmem:[%s1 + $0x8] sm:$0xff]
  %v24 = vld [vmem:[%s1 + $0x10] sm:$0xff]
  %v25 = vld [vmem:[%s1 + $0x18] sm:$0xff]
  %v26 = vld [vmem:[%s1 + $0x20] sm:$0xff]
  %v27 = vld [vmem:[%s1 + $0x28] sm:$0xff]
  %v28 = vld [vmem:[%s1 + $0x30] sm:$0xff]
  %v29 = vld [vmem:[%s1 + $0x38] sm:$0xff]
  %v30 = vld [vmem:[%s1 + $0x40] sm:$0xff]
  %v31 = vld [vmem:[%s1 + $0x48] sm:$0xff]
  %v32 = vld [vmem:[%s1 + $0x50] sm:$0xff]
  %v33 = vld [vmem:[%s1 + $0x58] sm:$0xff]
  %v34 = vld [vmem:[%s1 + $0x60] sm:$0xff]
  %v35 = vld [vmem:[%s1 + $0x68] sm:$0xff]
  %v36 = vld [vmem:[%s1 + $0x70] sm:$0xff]
  %v37 = vld [vmem:[%s1 + $0x78] sm:$0xff]
  %v38 = vld [vmem:[%s1 + $0x80] sm:$0xff]
  %v39 = vld [vmem:[%s1 + $0x88] sm:$0xff]
  %v40 = vld [vmem:[%s1 + $0x90] sm:$0xff]
  %v41 = vld [vmem:[%s1 + $0x98] sm:$0xff]
  %v42 = vld [vmem:[%s1 + $0xa0] sm:$0xff]
  %v43 = vld [vmem:[%s1 + $0xa8] sm:$0xff]
  %v44 = vld [vmem:[%s1 + $0xb0] sm:$0xff]
  %v45 = vld [vmem:[%s1 + $0xb8] sm:$0xff]
  %v46 = vld [vmem:[%s1 + $0xc0] sm:$0xff]
  %v47 = vld [vmem:[%s1 + $0xc8] sm:$0xff]
  %v48 = vld [vmem:[%s1 + $0xd0] sm:$0xff]
  %v49 = vld [vmem:[%s1 + $0xd8] sm:$0xff]
  %v50 = vld [vmem:[%s1 + $0xe0] sm:$0xff]
  %v51 = vld [vmem:[%s1 + $0xe8] sm:$0xff]
  %v52 = vld [vmem:[%s1 + $0xf0] sm:$0xff]
  %v53 = vld [vmem:[%s1 + $0xf8] sm:$0xff]
  %v54 = vld [vmem:[%s2] sm:$0xf]
  %v56 = vperm.slane %v54, 0
  %v57 = vperm.slane %v54, 1
  %v58 = vperm.slane %v54, 2
  %v59 = vperm.slane %v54, 3
  %v66 = vunpack.c.l.b16 %v20
  %v67 = vunpack.c.l.b16 %v21
  %v68 = vpack.c.b16 %v67, %v66
  %v102 = vunpack.c.l.b16 %v22
  %v103 = vunpack.c.h.b16 %v22
  %v104 = vunpack.c.l.b16 %v23
  %v105 = vunpack.c.h.b16 %v23
  %v106 = vunpack.c.l.b16 %v24
  %v107 = vunpack.c.h.b16 %v24
  %v108 = vunpack.c.l.b16 %v25
  %v109 = vunpack.c.h.b16 %v25
  %v110 = vunpack.c.l.b16 %v26
  %v111 = vunpack.c.h.b16 %v26
  %v112 = vunpack.c.l.b16 %v27
  %v113 = vunpack.c.h.b16 %v27
  %v114 = vunpack.c.l.b16 %v28
  %v115 = vunpack.c.h.b16 %v28
  %v116 = vunpack.c.l.b16 %v29
  %v117 = vunpack.c.h.b16 %v29
  %v118 = vunpack.c.l.b16 %v30
  %v119 = vunpack.c.h.b16 %v30
  %v120 = vunpack.c.l.b16 %v31
  %v121 = vunpack.c.h.b16 %v31
  %v122 = vunpack.c.l.b16 %v32
  %v123 = vunpack.c.h.b16 %v32
  %v124 = vunpack.c.l.b16 %v33
  %v125 = vunpack.c.h.b16 %v33
  %v126 = vunpack.c.l.b16 %v34
  %v127 = vunpack.c.h.b16 %v34
  %v128 = vunpack.c.l.b16 %v35
  %v129 = vunpack.c.h.b16 %v35
  %v130 = vunpack.c.l.b16 %v36
  %v131 = vunpack.c.h.b16 %v36
  %v132 = vunpack.c.l.b16 %v37
  %v133 = vunpack.c.h.b16 %v37
  %v134 = vunpack.c.l.b16 %v38
  %v135 = vunpack.c.h.b16 %v38
  %v136 = vunpack.c.l.b16 %v39
  %v137 = vunpack.c.h.b16 %v39
  %v138 = vunpack.c.l.b16 %v40
  %v139 = vunpack.c.h.b16 %v40
  %v140 = vunpack.c.l.b16 %v41
  %v141 = vunpack.c.h.b16 %v41
  %v142 = vunpack.c.l.b16 %v42
  %v143 = vunpack.c.h.b16 %v42
  %v144 = vunpack.c.l.b16 %v43
  %v145 = vunpack.c.h.b16 %v43
  %v146 = vunpack.c.l.b16 %v44
  %v147 = vunpack.c.h.b16 %v44
  %v148 = vunpack.c.l.b16 %v45
  %v149 = vunpack.c.h.b16 %v45
  %v150 = vunpack.c.l.b16 %v46
  %v151 = vunpack.c.h.b16 %v46
  %v152 = vunpack.c.l.b16 %v47
  %v153 = vunpack.c.h.b16 %v47
  %v154 = vunpack.c.l.b16 %v48
  %v155 = vunpack.c.h.b16 %v48
  %v156 = vunpack.c.l.b16 %v49
  %v157 = vunpack.c.h.b16 %v49
  %v158 = vunpack.c.l.b16 %v50
  %v159 = vunpack.c.h.b16 %v50
  %v160 = vunpack.c.l.b16 %v51
  %v161 = vunpack.c.h.b16 %v51
  %v162 = vunpack.c.l.b16 %v52
  %v163 = vunpack.c.h.b16 %v52
  %v164 = vunpack.c.l.b16 %v53
  %v165 = vunpack.c.h.b16 %v53
  %v166 = vpack.c.b16 %v106, %v102
  %v167 = vpack.c.b16 %v107, %v103
  %v168 = vpack.c.b16 %v108, %v104
  %v169 = vpack.c.b16 %v109, %v105
  %v170 = vpack.c.b16 %v114, %v110
  %v171 = vpack.c.b16 %v115, %v111
  %v172 = vpack.c.b16 %v116, %v112
  %v173 = vpack.c.b16 %v117, %v113
  %v174 = vpack.c.b16 %v122, %v118
  %v175 = vpack.c.b16 %v123, %v119
  %v176 = vpack.c.b16 %v124, %v120
  %v177 = vpack.c.b16 %v125, %v121
  %v178 = vpack.c.b16 %v130, %v126
  %v179 = vpack.c.b16 %v131, %v127
  %v180 = vpack.c.b16 %v132, %v128
  %v181 = vpack.c.b16 %v133, %v129
  %v182 = vpack.c.b16 %v138, %v134
  %v183 = vpack.c.b16 %v139, %v135
  %v184 = vpack.c.b16 %v140, %v136
  %v185 = vpack.c.b16 %v141, %v137
  %v186 = vpack.c.b16 %v146, %v142
  %v187 = vpack.c.b16 %v147, %v143
  %v188 = vpack.c.b16 %v148, %v144
  %v189 = vpack.c.b16 %v149, %v145
  %v190 = vpack.c.b16 %v154, %v150
  %v191 = vpack.c.b16 %v155, %v151
  %v192 = vpack.c.b16 %v156, %v152
  %v193 = vpack.c.b16 %v157, %v153
  %v194 = vpack.c.b16 %v162, %v158
  %v195 = vpack.c.b16 %v163, %v159
  %v196 = vpack.c.b16 %v164, %v160
  %v197 = vpack.c.b16 %v165, %v161
  %230 = vmatpush.bf16.msra.mxu0 %v194
  %231 = vmatpush.bf16.msra.mxu0 %v190
  %232 = vmatpush.bf16.msra.mxu0 %v186
  %233 = vmatpush.bf16.msra.mxu0 %v182
  %234 = vmatpush.bf16.msra.mxu0 %v178
  %235 = vmatpush.bf16.msra.mxu0 %v174
  %236 = vmatpush.bf16.msra.mxu0 %v170
  %237 = vmatpush.bf16.msra.mxu0 %v166
  %238 = vmatmul.bf16.gmra.mxu0 %v68
  %v239 = vpop.f32.mrf.mxu0
  %v240 = vadd.f32 %v56, %v239
  %v241 = vpop.f32.mrf.mxu0
  %v242 = vadd.f32 %v56, %v241
  %243 = vdwg.mxu0
  %244 = vmatpush.bf16.msra.mxu0 %v195
  %245 = vmatpush.bf16.msra.mxu0 %v191
  %246 = vmatpush.bf16.msra.mxu0 %v187
  %247 = vmatpush.bf16.msra.mxu0 %v183
  %248 = vmatpush.bf16.msra.mxu0 %v179
  %249 = vmatpush.bf16.msra.mxu0 %v175
  %250 = vmatpush.bf16.msra.mxu0 %v171
  %251 = vmatpush.bf16.msra.mxu0 %v167
  %252 = vmatmul.bf16.gmra.mxu0 %v68
  %v253 = vpop.f32.mrf.mxu0
  %v254 = vadd.f32 %v57, %v253
  %v255 = vpop.f32.mrf.mxu0
  %v256 = vadd.f32 %v57, %v255
  %257 = vdwg.mxu0
  %258 = vmatpush.bf16.msra.mxu0 %v196
  %259 = vmatpush.bf16.msra.mxu0 %v192
  %260 = vmatpush.bf16.msra.mxu0 %v188
  %261 = vmatpush.bf16.msra.mxu0 %v184
  %262 = vmatpush.bf16.msra.mxu0 %v180
  %263 = vmatpush.bf16.msra.mxu0 %v176
  %264 = vmatpush.bf16.msra.mxu0 %v172
  %265 = vmatpush.bf16.msra.mxu0 %v168
  %266 = vmatmul.bf16.gmra.mxu0 %v68
  %v267 = vpop.f32.mrf.mxu0
  %v268 = vadd.f32 %v58, %v267
  %v269 = vpop.f32.mrf.mxu0
  %v270 = vadd.f32 %v58, %v269
  %271 = vdwg.mxu0
  %272 = vmatpush.bf16.msra.mxu0 %v197
  %273 = vmatpush.bf16.msra.mxu0 %v193
  %274 = vmatpush.bf16.msra.mxu0 %v189
  %275 = vmatpush.bf16.msra.mxu0 %v185
  %276 = vmatpush.bf16.msra.mxu0 %v181
  %277 = vmatpush.bf16.msra.mxu0 %v177
  %278 = vmatpush.bf16.msra.mxu0 %v173
  %279 = vmatpush.bf16.msra.mxu0 %v169
  %280 = vmatmul.bf16.gmra.mxu0 %v68
  %v281 = vpop.f32.mrf.mxu0
  %v282 = vadd.f32 %v59, %v281
  %v283 = vpop.f32.mrf.mxu0
  %v284 = vadd.f32 %v59, %v283
  %285 = vdwg.mxu0
  %v286 = vmax.f32 %v240, 0.0
  %v287 = vmax.f32 %v254, 0.0
  %v288 = vmax.f32 %v268, 0.0
  %v289 = vmax.f32 %v282, 0.0
  %v290 = vmax.f32 %v242, 0.0
  %v291 = vmax.f32 %v256, 0.0
  %v292 = vmax.f32 %v270, 0.0
  %v293 = vmax.f32 %v284, 0.0
  %v294 = vpack.c.bf16 %v290, %v286
  %v295 = vpack.c.bf16 %v291, %v287
  %v296 = vpack.c.bf16 %v292, %v288
  %v297 = vpack.c.bf16 %v293, %v289
  %v298 = vld [vmem:[%s3] sm:$0xf]
  %v299 = vld [vmem:[%s3 + $0x4] sm:$0xf]
  %v300 = vld [vmem:[%s3 + $0x8] sm:$0xf]
  %v301 = vld [vmem:[%s3 + $0xc] sm:$0xf]
  %v302 = vld [vmem:[%s3 + $0x10] sm:$0xf]
  %v303 = vld [vmem:[%s3 + $0x14] sm:$0xf]
  %v304 = vld [vmem:[%s3 + $0x18] sm:$0xf]
  %v305 = vld [vmem:[%s3 + $0x1c] sm:$0xf]
  %v306 = vld [vmem:[%s3 + $0x20] sm:$0xf]
  %v307 = vld [vmem:[%s3 + $0x24] sm:$0xf]
  %v308 = vld [vmem:[%s3 + $0x28] sm:$0xf]
  %v309 = vld [vmem:[%s3 + $0x2c] sm:$0xf]
  %v310 = vld [vmem:[%s3 + $0x30] sm:$0xf]
  %v311 = vld [vmem:[%s3 + $0x34] sm:$0xf]
  %v312 = vld [vmem:[%s3 + $0x38] sm:$0xf]
  %v313 = vld [vmem:[%s3 + $0x3c] sm:$0xf]
  %v314 = vld [vmem:[%s3 + $0x40] sm:$0xf]
  %v315 = vld [vmem:[%s3 + $0x44] sm:$0xf]
  %v316 = vld [vmem:[%s3 + $0x48] sm:$0xf]
  %v317 = vld [vmem:[%s3 + $0x4c] sm:$0xf]
  %v318 = vld [vmem:[%s3 + $0x50] sm:$0xf]
  %v319 = vld [vmem:[%s3 + $0x54] sm:$0xf]
  %v320 = vld [vmem:[%s3 + $0x58] sm:$0xf]
  %v321 = vld [vmem:[%s3 + $0x5c] sm:$0xf]
  %v322 = vld [vmem:[%s3 + $0x60] sm:$0xf]
  %v323 = vld [vmem:[%s3 + $0x64] sm:$0xf]
  %v324 = vld [vmem:[%s3 + $0x68] sm:$0xf]
  %v325 = vld [vmem:[%s3 + $0x6c] sm:$0xf]
  %v326 = vld [vmem:[%s3 + $0x70] sm:$0xf]
  %v327 = vld [vmem:[%s3 + $0x74] sm:$0xf]
  %v328 = vld [vmem:[%s3 + $0x78] sm:$0xf]
  %v329 = vld [vmem:[%s3 + $0x7c] sm:$0xf]
  %v330 = vld [vmem:[%s3 + $0x80] sm:$0xf]
  %v331 = vld [vmem:[%s3 + $0x84] sm:$0xf]
  %v332 = vld [vmem:[%s3 + $0x88] sm:$0xf]
  %v333 = vld [vmem:[%s3 + $0x8c] sm:$0xf]
  %v334 = vld [vmem:[%s3 + $0x90] sm:$0xf]
  %v335 = vld [vmem:[%s3 + $0x94] sm:$0xf]
  %v336 = vld [vmem:[%s3 + $0x98] sm:$0xf]
  %v337 = vld [vmem:[%s3 + $0x9c] sm:$0xf]
  %v338 = vld [vmem:[%s3 + $0xa0] sm:$0xf]
  %v339 = vld [vmem:[%s3 + $0xa4] sm:$0xf]
  %v340 = vld [vmem:[%s3 + $0xa8] sm:$0xf]
  %v341 = vld [vmem:[%s3 + $0xac] sm:$0xf]
  %v342 = vld [vmem:[%s3 + $0xb0] sm:$0xf]
  %v343 = vld [vmem:[%s3 + $0xb4] sm:$0xf]
  %v344 = vld [vmem:[%s3 + $0xb8] sm:$0xf]
  %v345 = vld [vmem:[%s3 + $0xbc] sm:$0xf]
  %v346 = vld [vmem:[%s3 + $0xc0] sm:$0xf]
  %v347 = vld [vmem:[%s3 + $0xc4] sm:$0xf]
  %v348 = vld [vmem:[%s3 + $0xc8] sm:$0xf]
  %v349 = vld [vmem:[%s3 + $0xcc] sm:$0xf]
  %v350 = vld [vmem:[%s3 + $0xd0] sm:$0xf]
  %v351 = vld [vmem:[%s3 + $0xd4] sm:$0xf]
  %v352 = vld [vmem:[%s3 + $0xd8] sm:$0xf]
  %v353 = vld [vmem:[%s3 + $0xdc] sm:$0xf]
  %v354 = vld [vmem:[%s3 + $0xe0] sm:$0xf]
  %v355 = vld [vmem:[%s3 + $0xe4] sm:$0xf]
  %v356 = vld [vmem:[%s3 + $0xe8] sm:$0xf]
  %v357 = vld [vmem:[%s3 + $0xec] sm:$0xf]
  %v358 = vld [vmem:[%s3 + $0xf0] sm:$0xf]
  %v359 = vld [vmem:[%s3 + $0xf4] sm:$0xf]
  %v360 = vld [vmem:[%s3 + $0xf8] sm:$0xf]
  %v361 = vld [vmem:[%s3 + $0xfc] sm:$0xf]
  %v362 = vld [vmem:[%s4] sm:$0x1]
  %v364 = vperm.slane %v362, 0
  %v430 = vunpack.c.l.b16 %v298
  %v431 = vunpack.c.l.b16 %v299
  %v432 = vunpack.c.l.b16 %v300
  %v433 = vunpack.c.l.b16 %v301
  %v434 = vunpack.c.l.b16 %v302
  %v435 = vunpack.c.l.b16 %v303
  %v436 = vunpack.c.l.b16 %v304
  %v437 = vunpack.c.l.b16 %v305
  %v438 = vunpack.c.l.b16 %v306
  %v439 = vunpack.c.l.b16 %v307
  %v440 = vunpack.c.l.b16 %v308
  %v441 = vunpack.c.l.b16 %v309
  %v442 = vunpack.c.l.b16 %v310
  %v443 = vunpack.c.l.b16 %v311
  %v444 = vunpack.c.l.b16 %v312
  %v445 = vunpack.c.l.b16 %v313
  %v446 = vunpack.c.l.b16 %v314
  %v447 = vunpack.c.l.b16 %v315
  %v448 = vunpack.c.l.b16 %v316
  %v449 = vunpack.c.l.b16 %v317
  %v450 = vunpack.c.l.b16 %v318
  %v451 = vunpack.c.l.b16 %v319
  %v452 = vunpack.c.l.b16 %v320
  %v453 = vunpack.c.l.b16 %v321
  %v454 = vunpack.c.l.b16 %v322
  %v455 = vunpack.c.l.b16 %v323
  %v456 = vunpack.c.l.b16 %v324
  %v457 = vunpack.c.l.b16 %v325
  %v458 = vunpack.c.l.b16 %v326
  %v459 = vunpack.c.l.b16 %v327
  %v460 = vunpack.c.l.b16 %v328
  %v461 = vunpack.c.l.b16 %v329
  %v462 = vunpack.c.l.b16 %v330
  %v463 = vunpack.c.l.b16 %v331
  %v464 = vunpack.c.l.b16 %v332
  %v465 = vunpack.c.l.b16 %v333
  %v466 = vunpack.c.l.b16 %v334
  %v467 = vunpack.c.l.b16 %v335
  %v468 = vunpack.c.l.b16 %v336
  %v469 = vunpack.c.l.b16 %v337
  %v470 = vunpack.c.l.b16 %v338
  %v471 = vunpack.c.l.b16 %v339
  %v472 = vunpack.c.l.b16 %v340
  %v473 = vunpack.c.l.b16 %v341
  %v474 = vunpack.c.l.b16 %v342
  %v475 = vunpack.c.l.b16 %v343
  %v476 = vunpack.c.l.b16 %v344
  %v477 = vunpack.c.l.b16 %v345
  %v478 = vunpack.c.l.b16 %v346
  %v479 = vunpack.c.l.b16 %v347
  %v480 = vunpack.c.l.b16 %v348
  %v481 = vunpack.c.l.b16 %v349
  %v482 = vunpack.c.l.b16 %v350
  %v483 = vunpack.c.l.b16 %v351
  %v484 = vunpack.c.l.b16 %v352
  %v485 = vunpack.c.l.b16 %v353
  %v486 = vunpack.c.l.b16 %v354
  %v487 = vunpack.c.l.b16 %v355
  %v488 = vunpack.c.l.b16 %v356
  %v489 = vunpack.c.l.b16 %v357
  %v490 = vunpack.c.l.b16 %v358
  %v491 = vunpack.c.l.b16 %v359
  %v492 = vunpack.c.l.b16 %v360
  %v493 = vunpack.c.l.b16 %v361
  %v494 = vpack.c.b16 %v431, %v430
  %v495 = vpack.c.b16 %v433, %v432
  %v496 = vpack.c.b16 %v435, %v434
  %v497 = vpack.c.b16 %v437, %v436
  %v498 = vpack.c.b16 %v439, %v438
  %v499 = vpack.c.b16 %v441, %v440
  %v500 = vpack.c.b16 %v443, %v442
  %v501 = vpack.c.b16 %v445, %v444
  %v502 = vpack.c.b16 %v447, %v446
  %v503 = vpack.c.b16 %v449, %v448
  %v504 = vpack.c.b16 %v451, %v450
  %v505 = vpack.c.b16 %v453, %v452
  %v506 = vpack.c.b16 %v455, %v454
  %v507 = vpack.c.b16 %v457, %v456
  %v508 = vpack.c.b16 %v459, %v458
  %v509 = vpack.c.b16 %v461, %v460
  %v510 = vpack.c.b16 %v463, %v462
  %v511 = vpack.c.b16 %v465, %v464
  %v512 = vpack.c.b16 %v467, %v466
  %v513 = vpack.c.b16 %v469, %v468
  %v514 = vpack.c.b16 %v471, %v470
  %v515 = vpack.c.b16 %v473, %v472
  %v516 = vpack.c.b16 %v475, %v474
  %v517 = vpack.c.b16 %v477, %v476
  %v518 = vpack.c.b16 %v479, %v478
  %v519 = vpack.c.b16 %v481, %v480
  %v520 = vpack.c.b16 %v483, %v482
  %v521 = vpack.c.b16 %v485, %v484
  %v522 = vpack.c.b16 %v487, %v486
  %v523 = vpack.c.b16 %v489, %v488
  %v524 = vpack.c.b16 %v491, %v490
  %v525 = vpack.c.b16 %v493, %v492
  %558 = vmatpush.bf16.msra.mxu0 %v501
  %559 = vmatpush.bf16.msra.mxu0 %v500
  %560 = vmatpush.bf16.msra.mxu0 %v499
  %561 = vmatpush.bf16.msra.mxu0 %v498
  %562 = vmatpush.bf16.msra.mxu0 %v497
  %563 = vmatpush.bf16.msra.mxu0 %v496
  %564 = vmatpush.bf16.msra.mxu0 %v495
  %565 = vmatpush.bf16.msra.mxu0 %v494
  %566 = vmatmul.bf16.gmra.mxu0 %v294
  %v567 = vpop.f32.mrf.mxu0
  %v568 = vadd.f32 %v364, %v567
  %v569 = vpop.f32.mrf.mxu0
  %v570 = vadd.f32 %v364, %v569
  %571 = vdwg.mxu0
  %572 = vmatpush.bf16.msra.mxu0 %v509
  %573 = vmatpush.bf16.msra.mxu0 %v508
  %574 = vmatpush.bf16.msra.mxu0 %v507
  %575 = vmatpush.bf16.msra.mxu0 %v506
  %576 = vmatpush.bf16.msra.mxu0 %v505
  %577 = vmatpush.bf16.msra.mxu0 %v504
  %578 = vmatpush.bf16.msra.mxu0 %v503
  %579 = vmatpush.bf16.msra.mxu0 %v502
  %580 = vmatmul.bf16.gmra.mxu0 %v295
  %v581 = vpop.f32.mrf.mxu0
  %v582 = vadd.f32 %v568, %v581
  %v583 = vpop.f32.mrf.mxu0
  %v584 = vadd.f32 %v570, %v583
  %585 = vdwg.mxu0
  %586 = vmatpush.bf16.msra.mxu0 %v517
  %587 = vmatpush.bf16.msra.mxu0 %v516
  %588 = vmatpush.bf16.msra.mxu0 %v515
  %589 = vmatpush.bf16.msra.mxu0 %v514
  %590 = vmatpush.bf16.msra.mxu0 %v513
  %591 = vmatpush.bf16.msra.mxu0 %v512
  %592 = vmatpush.bf16.msra.mxu0 %v511
  %593 = vmatpush.bf16.msra.mxu0 %v510
  %594 = vmatmul.bf16.gmra.mxu0 %v296
  %v595 = vpop.f32.mrf.mxu0
  %v596 = vadd.f32 %v582, %v595
  %v597 = vpop.f32.mrf.mxu0
  %v598 = vadd.f32 %v584, %v597
  %599 = vdwg.mxu0
  %600 = vmatpush.bf16.msra.mxu0 %v525
  %601 = vmatpush.bf16.msra.mxu0 %v524
  %602 = vmatpush.bf16.msra.mxu0 %v523
  %603 = vmatpush.bf16.msra.mxu0 %v522
  %604 = vmatpush.bf16.msra.mxu0 %v521
  %605 = vmatpush.bf16.msra.mxu0 %v520
  %606 = vmatpush.bf16.msra.mxu0 %v519
  %607 = vmatpush.bf16.msra.mxu0 %v518
  %608 = vmatmul.bf16.gmra.mxu0 %v297
  %v609 = vpop.f32.mrf.mxu0
  %v610 = vadd.f32 %v596, %v609
  %v611 = vpop.f32.mrf.mxu0
  %v612 = vadd.f32 %v598, %v611
  %613 = vdwg.mxu0
  %614 = vst [vmem:[%s5] sm:$0xff] %v610
  %615 = vst [vmem:[%s5 + $0x8] sm:$0xff] %v612
  // Predicated region
  $region22: #{dqn_forward.7} parent=0 // pred_check
    _
  $region23: #{dqn_forward.7} parent=0 // pred_check_branch
    %617 = sbr.rel (0) target = $region25
  $region24: #{dqn_forward.7} parent=0 // pred_region
    _
  $region25: #{dqn_forward.7} parent=0 // pred_fallthru
    _
  // Predicated region
  $region26: #{dqn_forward.7} parent=0 // pred_check
    _
  $region27: #{dqn_forward.7} parent=0 // pred_check_branch
    %619 = sbr.rel (0) target = $region29
  $region28: #{dqn_forward.7} parent=0 // pred_region
    _
  $region29: #{dqn_forward.7} parent=0 // pred_fallthru
    _

</llo_original>
